<compile_context>
chip_gen: v5e
topology: v5e:2x2
jax: 0.10.0
libtpu: 0.0.40
codegen_flags: <defaults>
</compile_context>

<pallas_src>
import jax
import jax.numpy as jnp
import numpy as np
from jax.experimental import pallas as pl
from jax.experimental.pallas import tpu as pltpu

# Small shapes consistent with the module: EncoderConv(input_samples=16, dim=32,
# n_classes=8) applied to a batch of 2 signals.
B = 2                          # batch
SAMPLES = 16                   # input_samples (length preserved: k=5, pad=2, stride=1)
DIM = 32                       # dim
NCLS = 8                       # n_classes
C1 = DIM // 2                  # 16 channels in the first two blocks
K, PAD = 5, 2                  # Conv1d kernel size / padding
L = SAMPLES
ROWS = B * L                   # activations live as (B*L, C) position-major rows
FF = DIM * SAMPLES // 4        # classifier hidden width = 128
EPS = 1e-5                     # BatchNorm eps
LANES = 128

# Conv blocks 2..5 (block 1 has C_in = 1 and is handled separately on the VPU).
C_INS = (C1, C1, DIM, DIM)
C_OUTS = (C1, DIM, DIM, DIM)

# Weight-slab row layout (all offsets are multiples of 16 -> bf16 (16,128) tile aligned).
W_OFFS = (0, 80, 160, 320)     # conv blocks 2..5: rows off + k*cin + ci, cols [0, cout)
FC1_OFF, FC2_OFF = 480, 992    # fc1: rows FC1_OFF + pos*DIM + c ; fc2: rows FC2_OFF + f
WSLAB_ROWS = 1120
# Shift-slab (f32, 16 x 128) rows: 0..4 conv BN shifts, 5 fc1 BN shift, 6 fc2 bias,
# 8..12 the five layer-1 tap weight rows (kept in f32, one row per tap).
W1_ROW = 8


def encoder_conv_kernel(x_ref, w_ref, s_ref, o_ref, act_ref):
    f32, bf16 = jnp.float32, jnp.bfloat16

    # Per-tap validity masks (shared by every conv layer).  pos = row mod L.
    row = jax.lax.broadcasted_iota(jnp.int32, (ROWS, 1), 0)
    pos = row & (L - 1)                              # L is a power of two
    masks = []
    for k in range(K):
        d = k - PAD
        if d == 0:
            masks.append(None)
        else:
            m = (pos >= max(0, -d)) & (pos < min(L, L - d))
            masks.append(m.astype(f32))

    def tap(v, k):
        """v[r + (k - PAD), :], zeroed where the tap falls outside its own signal."""
        sh = (PAD - k) % ROWS
        if sh == 0:
            return v
        return pltpu.roll(v, shift=sh, axis=0) * masks[k]

    # ---- ConvBlock 1 (C_in = 1): five rank-1 taps on the VPU/XLU (no MXU). ----
    x = x_ref[...]                                               # (ROWS, 1) f32
    acc = None
    for k in range(K):
        w_row = s_ref[W1_ROW + k:W1_ROW + k + 1, :C1]            # (1, C1) f32
        term = tap(x * w_row, k)                                 # (ROWS, C1)
        acc = term if acc is None else acc + term
    act = jnp.maximum(acc + s_ref[0:1, :C1], 0.0)

    # ---- ConvBlocks 2..5: K halo-masked rolls + accumulated MXU matmuls. ----
    for i, (c_in, c_out) in enumerate(zip(C_INS, C_OUTS)):
        w_off = W_OFFS[i]
        acc = None
        for k in range(K):
            a_k = tap(act, k).astype(bf16)                       # (ROWS, c_in)
            w_k = w_ref[w_off + k * c_in:w_off + (k + 1) * c_in, :c_out]
            term = jnp.dot(a_k, w_k, preferred_element_type=f32)
            acc = term if acc is None else acc + term
        act = jnp.maximum(acc + s_ref[i + 1:i + 2, :c_out], 0.0)  # (ROWS, c_out)

    # ---- Classifier.  FC1 contracts over (position, channel); position lives on
    # sublanes, so rather than materializing a lane-dense flatten (masked stores) or
    # relying on a sublane->lane reshape, accumulate one aligned (B, DIM) @ (DIM, FF)
    # matmul per position from sublane-strided row pairs of the activation scratch.
    act_ref[...] = act                                           # one aligned store
    acc = None
    for p in range(L):
        a_p = act_ref[pl.ds(p, B, stride=L), :].astype(bf16)     # rows p, p+L -> (B, DIM)
        w_p = w_ref[FC1_OFF + p * DIM:FC1_OFF + (p + 1) * DIM, :FF]
        term = jnp.dot(a_p, w_p, preferred_element_type=f32)     # (B, FF)
        acc = term if acc is None else acc + term
    h = jnp.maximum(acc + s_ref[5:6, :FF], 0.0)                  # Dropout(p=0) == id
    # TODO(synk): BatchNorm layers use folded eval-mode running statistics; train-mode
    # batch statistics are not computed in-kernel.
    o_ref[...] = (jnp.dot(h.astype(bf16), w_ref[FC2_OFF:FC2_OFF + FF, :NCLS],
                          preferred_element_type=f32) + s_ref[6:7, :NCLS])


@jax.jit
def encoder_conv_forward(x, wslab, sslab):
    vmem = pl.BlockSpec(memory_space=pltpu.MemorySpace.VMEM)
    return pl.pallas_call(
        encoder_conv_kernel,
        out_shape=jax.ShapeDtypeStruct((B, NCLS), jnp.float32),
        in_specs=[vmem, vmem, vmem],
        out_specs=vmem,
        scratch_shapes=[pltpu.VMEM((ROWS, DIM), jnp.float32)],   # layer-5 activations
    )(x.reshape(ROWS, 1), wslab, sslab)


def pack_params(params):
    """One-time packing: fold eval-mode BatchNorms and lay out two VMEM slabs.

    Weight slab (bf16, 1120 x 128), 16-row-aligned blocks:
        conv i (i=2..5): rows W_OFFS[i-2] + k*cin + ci, cols [0,cout) = w[co,ci,k]*bn_scale
        fc1           : rows FC1_OFF + pos*DIM + c (position-major flatten), cols [0,FF)
        fc2           : rows FC2_OFF + f, cols [0, NCLS)
    Shift slab (f32, 16 x 128): rows 0..4 conv BN shifts, 5 fc1 BN shift, 6 fc2 bias,
        rows 8..12 the five layer-1 tap weight rows (C_in = 1, BN scale folded in).
    """
    wslab = np.zeros((WSLAB_ROWS, LANES), np.float32)
    sslab = np.zeros((16, LANES), np.float32)
    convs = params["conv"]

    # Layer 1 (C_in = 1): K rank-1 taps, kept exact in the f32 slab.
    w, g, b, rm, rv = (np.asarray(a, np.float32) for a in convs[0])
    s = g / np.sqrt(rv + EPS)
    sslab[W1_ROW:W1_ROW + K, :C1] = w[:, 0, :].T * s[None, :]    # [k, co] = w[co,0,k]*s
    sslab[0, :C1] = b - rm * s

    # Layers 2..5: (C_out, C_in, K) -> rows k*cin + ci, cols co, BN scale folded in.
    for i, blk in enumerate(convs[1:]):
        w, g, b, rm, rv = (np.asarray(a, np.float32) for a in blk)
        cout, cin, kk = w.shape
        s = g / np.sqrt(rv + EPS)
        wslab[W_OFFS[i]:W_OFFS[i] + kk * cin, :cout] = (
            np.transpose(w, (2, 1, 0)).reshape(kk * cin, cout) * s[None, :])
        sslab[i + 1, :cout] = b - rm * s

    # Classifier: fc1 permuted to the kernel's position-major flatten, BN folded in.
    g, b, rm, rv = (np.asarray(a, np.float32) for a in params["bn_fc"])
    s = g / np.sqrt(rv + EPS)
    fc1_w = np.asarray(params["fc1_w"], np.float32)
    wslab[FC1_OFF:FC1_OFF + L * DIM, :FF] = (
        fc1_w.reshape(FF, DIM, L).transpose(2, 1, 0).reshape(L * DIM, FF) * s[None, :])
    sslab[5, :FF] = (np.asarray(params["fc1_b"], np.float32) - rm) * s + b
    wslab[FC2_OFF:FC2_OFF + FF, :NCLS] = np.asarray(params["fc2_w"], np.float32).T
    sslab[6, :NCLS] = np.asarray(params["fc2_b"], np.float32)

    return jnp.asarray(wslab, jnp.bfloat16), jnp.asarray(sslab, jnp.float32)


def reference_encoder_conv(x, params):
    """Pure-JAX mirror of the PyTorch module (eval mode) — source of truth (f32)."""
    hp = jax.lax.Precision.HIGHEST
    z = x.reshape(-1, 1, SAMPLES)
    for (w, g, b, rm, rv) in params["conv"]:
        z = jax.lax.conv_general_dilated(
            z, w, window_strides=(1,), padding=[(PAD, PAD)],
            dimension_numbers=("NCH", "OIH", "NCH"), precision=hp)
        z = ((z - rm[None, :, None]) * jax.lax.rsqrt(rv + EPS)[None, :, None]
             * g[None, :, None] + b[None, :, None])
        z = jnp.maximum(z, 0.0)
    flat = z.reshape(z.shape[0], -1)                       # torch Flatten: (B, C*L)
    y = jnp.dot(flat, params["fc1_w"].T, precision=hp) + params["fc1_b"]
    g, b, rm, rv = params["bn_fc"]
    y = (y - rm) * jax.lax.rsqrt(rv + EPS) * g + b
    y = jnp.maximum(y, 0.0)                                # Dropout(p=0) == identity
    return jnp.dot(y, params["fc2_w"].T, precision=hp) + params["fc2_b"]


def make_params(key):
    """Random 'trained' parameters in the PyTorch layout (eval-mode BN stats)."""
    conv_dims = [(1, C1), (C1, C1), (C1, DIM), (DIM, DIM), (DIM, DIM)]
    keys = iter(jax.random.split(key, 5 * len(conv_dims) + 8))
    conv = []
    for cin, cout in conv_dims:
        w = jax.random.normal(next(keys), (cout, cin, K), jnp.float32) / np.sqrt(cin * K)
        g = 1.0 + 0.1 * jax.random.normal(next(keys), (cout,), jnp.float32)
        b = 0.1 * jax.random.normal(next(keys), (cout,), jnp.float32)
        rm = 0.1 * jax.random.normal(next(keys), (cout,), jnp.float32)
        rv = jax.random.uniform(next(keys), (cout,), jnp.float32, 0.5, 1.5)
        conv.append((w, g, b, rm, rv))
    fc1_w = jax.random.normal(next(keys), (FF, DIM * L), jnp.float32) / np.sqrt(DIM * L)
    fc1_b = 0.1 * jax.random.normal(next(keys), (FF,), jnp.float32)
    g = 1.0 + 0.1 * jax.random.normal(next(keys), (FF,), jnp.float32)
    b = 0.1 * jax.random.normal(next(keys), (FF,), jnp.float32)
    rm = 0.1 * jax.random.normal(next(keys), (FF,), jnp.float32)
    rv = jax.random.uniform(next(keys), (FF,), jnp.float32, 0.5, 1.5)
    fc2_w = jax.random.normal(next(keys), (NCLS, FF), jnp.float32) / np.sqrt(FF)
    fc2_b = 0.1 * jax.random.normal(next(keys), (NCLS,), jnp.float32)
    return dict(conv=conv, fc1_w=fc1_w, fc1_b=fc1_b, bn_fc=(g, b, rm, rv),
                fc2_w=fc2_w, fc2_b=fc2_b)


if __name__ == "__main__":
    key = jax.random.PRNGKey(0)
    kx, kp = jax.random.split(key)
    x = jax.random.normal(kx, (B, SAMPLES), jnp.float32)

    params = make_params(kp)
    # One-time packing (outside jit); the slabs stay device-resident across calls.
    wslab, sslab = pack_params(params)

    out = jax.block_until_ready(encoder_conv_forward(x, wslab, sslab))

    ref = reference_encoder_conv(x, params)
    # The kernel feeds the MXU bf16 operands (single pass per dot, per the perf
    # review); agreement with the f32 HIGHEST-precision reference is therefore at
    # bf16 level (~1e-3..1e-2), far below any structural-error scale (O(1)).
    np.testing.assert_allclose(np.asarray(out), np.asarray(ref), rtol=2e-2, atol=2e-2)

    print("KERNEL_OK")
</pallas_src>

<mosaic_0001>
module attributes {stable_mosaic.version = 11 : i64} {
  func.func @encoder_conv_kernel(%arg0: memref<32x1xf32, #tpu.memory_space<vmem>>, %arg1: memref<1120x128xbf16, #tpu.memory_space<vmem>>, %arg2: memref<16x128xf32, #tpu.memory_space<vmem>>, %arg3: memref<2x8xf32, #tpu.memory_space<vmem>>, %arg4: memref<32x32xf32, #tpu.memory_space<vmem>>) attributes {dimension_semantics = [], scalar_prefetch = 0 : i64, scratch_operands = 1 : i64, tpu.core_type = #tpu.core_type<tc>} {
    %0 = tpu.iota {dimensions = array<i32: 0>} : vector<32x1xi32>
    %c15_i32 = arith.constant 15 : i32
    %1 = vector.broadcast %c15_i32 : i32 to vector<32x1xi32>
    %2 = arith.andi %0, %1 : vector<32x1xi32>
    %c2_i32 = arith.constant 2 : i32
    %3 = vector.broadcast %c2_i32 : i32 to vector<32x1xi32>
    %4 = arith.cmpi sge, %2, %3 : vector<32x1xi32>
    %c16_i32 = arith.constant 16 : i32
    %5 = vector.broadcast %c16_i32 : i32 to vector<32x1xi32>
    %6 = arith.cmpi slt, %2, %5 : vector<32x1xi32>
    %7 = arith.andi %4, %6 : vector<32x1xi1>
    %8 = arith.extui %7 : vector<32x1xi1> to vector<32x1xi32>
    %9 = arith.sitofp %8 : vector<32x1xi32> to vector<32x1xf32>
    %c1_i32 = arith.constant 1 : i32
    %10 = vector.broadcast %c1_i32 : i32 to vector<32x1xi32>
    %11 = arith.cmpi sge, %2, %10 : vector<32x1xi32>
    %c16_i32_0 = arith.constant 16 : i32
    %12 = vector.broadcast %c16_i32_0 : i32 to vector<32x1xi32>
    %13 = arith.cmpi slt, %2, %12 : vector<32x1xi32>
    %14 = arith.andi %11, %13 : vector<32x1xi1>
    %15 = arith.extui %14 : vector<32x1xi1> to vector<32x1xi32>
    %16 = arith.sitofp %15 : vector<32x1xi32> to vector<32x1xf32>
    %c0_i32 = arith.constant 0 : i32
    %17 = vector.broadcast %c0_i32 : i32 to vector<32x1xi32>
    %18 = arith.cmpi sge, %2, %17 : vector<32x1xi32>
    %c15_i32_1 = arith.constant 15 : i32
    %19 = vector.broadcast %c15_i32_1 : i32 to vector<32x1xi32>
    %20 = arith.cmpi slt, %2, %19 : vector<32x1xi32>
    %21 = arith.andi %18, %20 : vector<32x1xi1>
    %22 = arith.extui %21 : vector<32x1xi1> to vector<32x1xi32>
    %23 = arith.sitofp %22 : vector<32x1xi32> to vector<32x1xf32>
    %c0_i32_2 = arith.constant 0 : i32
    %24 = vector.broadcast %c0_i32_2 : i32 to vector<32x1xi32>
    %25 = arith.cmpi sge, %2, %24 : vector<32x1xi32>
    %c14_i32 = arith.constant 14 : i32
    %26 = vector.broadcast %c14_i32 : i32 to vector<32x1xi32>
    %27 = arith.cmpi slt, %2, %26 : vector<32x1xi32>
    %28 = arith.andi %25, %27 : vector<32x1xi1>
    %29 = arith.extui %28 : vector<32x1xi1> to vector<32x1xi32>
    %30 = arith.sitofp %29 : vector<32x1xi32> to vector<32x1xf32>
    %c0 = arith.constant 0 : index
    %c0_3 = arith.constant 0 : index
    %31 = vector.load %arg0[%c0, %c0_3] : memref<32x1xf32, #tpu.memory_space<vmem>>, vector<32x1xf32>
    %c8 = arith.constant 8 : index
    %c0_4 = arith.constant 0 : index
    %32 = vector.load %arg2[%c8, %c0_4] : memref<16x128xf32, #tpu.memory_space<vmem>>, vector<1x16xf32>
    %33 = vector.broadcast %31 : vector<32x1xf32> to vector<32x16xf32>
    %34 = vector.broadcast %32 : vector<1x16xf32> to vector<32x16xf32>
    %35 = arith.mulf %33, %34 : vector<32x16xf32>
    %c2_i32_5 = arith.constant 2 : i32
    %36 = tpu.dynamic_rotate %35 by %c2_i32_5 dim 0 : vector<32x16xf32>, i32 -> vector<32x16xf32>
    %37 = vector.broadcast %9 : vector<32x1xf32> to vector<32x16xf32>
    %38 = arith.mulf %36, %37 : vector<32x16xf32>
    %c9 = arith.constant 9 : index
    %c0_6 = arith.constant 0 : index
    %39 = vector.load %arg2[%c9, %c0_6] : memref<16x128xf32, #tpu.memory_space<vmem>>, vector<1x16xf32>
    %40 = vector.broadcast %31 : vector<32x1xf32> to vector<32x16xf32>
    %41 = vector.broadcast %39 : vector<1x16xf32> to vector<32x16xf32>
    %42 = arith.mulf %40, %41 : vector<32x16xf32>
    %c1_i32_7 = arith.constant 1 : i32
    %43 = tpu.dynamic_rotate %42 by %c1_i32_7 dim 0 : vector<32x16xf32>, i32 -> vector<32x16xf32>
    %44 = vector.broadcast %16 : vector<32x1xf32> to vector<32x16xf32>
    %45 = arith.mulf %43, %44 : vector<32x16xf32>
    %46 = arith.addf %38, %45 : vector<32x16xf32>
    %c10 = arith.constant 10 : index
    %c0_8 = arith.constant 0 : index
    %47 = vector.load %arg2[%c10, %c0_8] : memref<16x128xf32, #tpu.memory_space<vmem>>, vector<1x16xf32>
    %48 = vector.broadcast %31 : vector<32x1xf32> to vector<32x16xf32>
    %49 = vector.broadcast %47 : vector<1x16xf32> to vector<32x16xf32>
    %50 = arith.mulf %48, %49 : vector<32x16xf32>
    %51 = arith.addf %46, %50 : vector<32x16xf32>
    %c11 = arith.constant 11 : index
    %c0_9 = arith.constant 0 : index
    %52 = vector.load %arg2[%c11, %c0_9] : memref<16x128xf32, #tpu.memory_space<vmem>>, vector<1x16xf32>
    %53 = vector.broadcast %31 : vector<32x1xf32> to vector<32x16xf32>
    %54 = vector.broadcast %52 : vector<1x16xf32> to vector<32x16xf32>
    %55 = arith.mulf %53, %54 : vector<32x16xf32>
    %c31_i32 = arith.constant 31 : i32
    %56 = tpu.dynamic_rotate %55 by %c31_i32 dim 0 : vector<32x16xf32>, i32 -> vector<32x16xf32>
    %57 = vector.broadcast %23 : vector<32x1xf32> to vector<32x16xf32>
    %58 = arith.mulf %56, %57 : vector<32x16xf32>
    %59 = arith.addf %51, %58 : vector<32x16xf32>
    %c12 = arith.constant 12 : index
    %c0_10 = arith.constant 0 : index
    %60 = vector.load %arg2[%c12, %c0_10] : memref<16x128xf32, #tpu.memory_space<vmem>>, vector<1x16xf32>
    %61 = vector.broadcast %31 : vector<32x1xf32> to vector<32x16xf32>
    %62 = vector.broadcast %60 : vector<1x16xf32> to vector<32x16xf32>
    %63 = arith.mulf %61, %62 : vector<32x16xf32>
    %c30_i32 = arith.constant 30 : i32
    %64 = tpu.dynamic_rotate %63 by %c30_i32 dim 0 : vector<32x16xf32>, i32 -> vector<32x16xf32>
    %65 = vector.broadcast %30 : vector<32x1xf32> to vector<32x16xf32>
    %66 = arith.mulf %64, %65 : vector<32x16xf32>
    %67 = arith.addf %59, %66 : vector<32x16xf32>
    %c0_11 = arith.constant 0 : index
    %c0_12 = arith.constant 0 : index
    %68 = vector.load %arg2[%c0_11, %c0_12] : memref<16x128xf32, #tpu.memory_space<vmem>>, vector<1x16xf32>
    %69 = vector.broadcast %68 : vector<1x16xf32> to vector<32x16xf32>
    %70 = arith.addf %67, %69 : vector<32x16xf32>
    %cst = arith.constant 0.000000e+00 : f32
    %71 = vector.broadcast %cst : f32 to vector<32x16xf32>
    %72 = arith.maximumf %70, %71 : vector<32x16xf32>
    %c2_i32_13 = arith.constant 2 : i32
    %73 = tpu.dynamic_rotate %72 by %c2_i32_13 dim 0 : vector<32x16xf32>, i32 -> vector<32x16xf32>
    %74 = vector.broadcast %9 : vector<32x1xf32> to vector<32x16xf32>
    %75 = arith.mulf %73, %74 : vector<32x16xf32>
    %76 = arith.truncf %75 : vector<32x16xf32> to vector<32x16xbf16>
    %c0_14 = arith.constant 0 : index
    %c0_15 = arith.constant 0 : index
    %77 = vector.load %arg1[%c0_14, %c0_15] : memref<1120x128xbf16, #tpu.memory_space<vmem>>, vector<16x16xbf16>
    %cst_16 = arith.constant dense<0.000000e+00> : vector<32x16xf32>
    %78 = tpu.matmul %76, %77, %cst_16 {dimension_numbers = #tpu.dot_dimension_numbers<[1], [0], [0], [1], [0, 0, 1, 1], [], []>} : vector<32x16xbf16>, vector<16x16xbf16>, vector<32x16xf32> -> vector<32x16xf32>
    %c1_i32_17 = arith.constant 1 : i32
    %79 = tpu.dynamic_rotate %72 by %c1_i32_17 dim 0 : vector<32x16xf32>, i32 -> vector<32x16xf32>
    %80 = vector.broadcast %16 : vector<32x1xf32> to vector<32x16xf32>
    %81 = arith.mulf %79, %80 : vector<32x16xf32>
    %82 = arith.truncf %81 : vector<32x16xf32> to vector<32x16xbf16>
    %c16 = arith.constant 16 : index
    %c0_18 = arith.constant 0 : index
    %83 = vector.load %arg1[%c16, %c0_18] : memref<1120x128xbf16, #tpu.memory_space<vmem>>, vector<16x16xbf16>
    %cst_19 = arith.constant dense<0.000000e+00> : vector<32x16xf32>
    %84 = tpu.matmul %82, %83, %cst_19 {dimension_numbers = #tpu.dot_dimension_numbers<[1], [0], [0], [1], [0, 0, 1, 1], [], []>} : vector<32x16xbf16>, vector<16x16xbf16>, vector<32x16xf32> -> vector<32x16xf32>
    %85 = arith.addf %78, %84 : vector<32x16xf32>
    %86 = arith.truncf %72 : vector<32x16xf32> to vector<32x16xbf16>
    %c32 = arith.constant 32 : index
    %c0_20 = arith.constant 0 : index
    %87 = vector.load %arg1[%c32, %c0_20] : memref<1120x128xbf16, #tpu.memory_space<vmem>>, vector<16x16xbf16>
    %cst_21 = arith.constant dense<0.000000e+00> : vector<32x16xf32>
    %88 = tpu.matmul %86, %87, %cst_21 {dimension_numbers = #tpu.dot_dimension_numbers<[1], [0], [0], [1], [0, 0, 1, 1], [], []>} : vector<32x16xbf16>, vector<16x16xbf16>, vector<32x16xf32> -> vector<32x16xf32>
    %89 = arith.addf %85, %88 : vector<32x16xf32>
    %c31_i32_22 = arith.constant 31 : i32
    %90 = tpu.dynamic_rotate %72 by %c31_i32_22 dim 0 : vector<32x16xf32>, i32 -> vector<32x16xf32>
    %91 = vector.broadcast %23 : vector<32x1xf32> to vector<32x16xf32>
    %92 = arith.mulf %90, %91 : vector<32x16xf32>
    %93 = arith.truncf %92 : vector<32x16xf32> to vector<32x16xbf16>
    %c48 = arith.constant 48 : index
    %c0_23 = arith.constant 0 : index
    %94 = vector.load %arg1[%c48, %c0_23] : memref<1120x128xbf16, #tpu.memory_space<vmem>>, vector<16x16xbf16>
    %cst_24 = arith.constant dense<0.000000e+00> : vector<32x16xf32>
    %95 = tpu.matmul %93, %94, %cst_24 {dimension_numbers = #tpu.dot_dimension_numbers<[1], [0], [0], [1], [0, 0, 1, 1], [], []>} : vector<32x16xbf16>, vector<16x16xbf16>, vector<32x16xf32> -> vector<32x16xf32>
    %96 = arith.addf %89, %95 : vector<32x16xf32>
    %c30_i32_25 = arith.constant 30 : i32
    %97 = tpu.dynamic_rotate %72 by %c30_i32_25 dim 0 : vector<32x16xf32>, i32 -> vector<32x16xf32>
    %98 = vector.broadcast %30 : vector<32x1xf32> to vector<32x16xf32>
    %99 = arith.mulf %97, %98 : vector<32x16xf32>
    %100 = arith.truncf %99 : vector<32x16xf32> to vector<32x16xbf16>
    %c64 = arith.constant 64 : index
    %c0_26 = arith.constant 0 : index
    %101 = vector.load %arg1[%c64, %c0_26] : memref<1120x128xbf16, #tpu.memory_space<vmem>>, vector<16x16xbf16>
    %cst_27 = arith.constant dense<0.000000e+00> : vector<32x16xf32>
    %102 = tpu.matmul %100, %101, %cst_27 {dimension_numbers = #tpu.dot_dimension_numbers<[1], [0], [0], [1], [0, 0, 1, 1], [], []>} : vector<32x16xbf16>, vector<16x16xbf16>, vector<32x16xf32> -> vector<32x16xf32>
    %103 = arith.addf %96, %102 : vector<32x16xf32>
    %c1 = arith.constant 1 : index
    %c0_28 = arith.constant 0 : index
    %104 = vector.load %arg2[%c1, %c0_28] : memref<16x128xf32, #tpu.memory_space<vmem>>, vector<1x16xf32>
    %105 = vector.broadcast %104 : vector<1x16xf32> to vector<32x16xf32>
    %106 = arith.addf %103, %105 : vector<32x16xf32>
    %cst_29 = arith.constant 0.000000e+00 : f32
    %107 = vector.broadcast %cst_29 : f32 to vector<32x16xf32>
    %108 = arith.maximumf %106, %107 : vector<32x16xf32>
    %c2_i32_30 = arith.constant 2 : i32
    %109 = tpu.dynamic_rotate %108 by %c2_i32_30 dim 0 : vector<32x16xf32>, i32 -> vector<32x16xf32>
    %110 = vector.broadcast %9 : vector<32x1xf32> to vector<32x16xf32>
    %111 = arith.mulf %109, %110 : vector<32x16xf32>
    %112 = arith.truncf %111 : vector<32x16xf32> to vector<32x16xbf16>
    %c80 = arith.constant 80 : index
    %c0_31 = arith.constant 0 : index
    %113 = vector.load %arg1[%c80, %c0_31] : memref<1120x128xbf16, #tpu.memory_space<vmem>>, vector<16x32xbf16>
    %cst_32 = arith.constant dense<0.000000e+00> : vector<32x32xf32>
    %114 = tpu.matmul %112, %113, %cst_32 {dimension_numbers = #tpu.dot_dimension_numbers<[1], [0], [0], [1], [0, 0, 1, 1], [], []>} : vector<32x16xbf16>, vector<16x32xbf16>, vector<32x32xf32> -> vector<32x32xf32>
    %c1_i32_33 = arith.constant 1 : i32
    %115 = tpu.dynamic_rotate %108 by %c1_i32_33 dim 0 : vector<32x16xf32>, i32 -> vector<32x16xf32>
    %116 = vector.broadcast %16 : vector<32x1xf32> to vector<32x16xf32>
    %117 = arith.mulf %115, %116 : vector<32x16xf32>
    %118 = arith.truncf %117 : vector<32x16xf32> to vector<32x16xbf16>
    %c96 = arith.constant 96 : index
    %c0_34 = arith.constant 0 : index
    %119 = vector.load %arg1[%c96, %c0_34] : memref<1120x128xbf16, #tpu.memory_space<vmem>>, vector<16x32xbf16>
    %cst_35 = arith.constant dense<0.000000e+00> : vector<32x32xf32>
    %120 = tpu.matmul %118, %119, %cst_35 {dimension_numbers = #tpu.dot_dimension_numbers<[1], [0], [0], [1], [0, 0, 1, 1], [], []>} : vector<32x16xbf16>, vector<16x32xbf16>, vector<32x32xf32> -> vector<32x32xf32>
    %121 = arith.addf %114, %120 : vector<32x32xf32>
    %122 = arith.truncf %108 : vector<32x16xf32> to vector<32x16xbf16>
    %c112 = arith.constant 112 : index
    %c0_36 = arith.constant 0 : index
    %123 = vector.load %arg1[%c112, %c0_36] : memref<1120x128xbf16, #tpu.memory_space<vmem>>, vector<16x32xbf16>
    %cst_37 = arith.constant dense<0.000000e+00> : vector<32x32xf32>
    %124 = tpu.matmul %122, %123, %cst_37 {dimension_numbers = #tpu.dot_dimension_numbers<[1], [0], [0], [1], [0, 0, 1, 1], [], []>} : vector<32x16xbf16>, vector<16x32xbf16>, vector<32x32xf32> -> vector<32x32xf32>
    %125 = arith.addf %121, %124 : vector<32x32xf32>
    %c31_i32_38 = arith.constant 31 : i32
    %126 = tpu.dynamic_rotate %108 by %c31_i32_38 dim 0 : vector<32x16xf32>, i32 -> vector<32x16xf32>
    %127 = vector.broadcast %23 : vector<32x1xf32> to vector<32x16xf32>
    %128 = arith.mulf %126, %127 : vector<32x16xf32>
    %129 = arith.truncf %128 : vector<32x16xf32> to vector<32x16xbf16>
    %c128 = arith.constant 128 : index
    %c0_39 = arith.constant 0 : index
    %130 = vector.load %arg1[%c128, %c0_39] : memref<1120x128xbf16, #tpu.memory_space<vmem>>, vector<16x32xbf16>
    %cst_40 = arith.constant dense<0.000000e+00> : vector<32x32xf32>
    %131 = tpu.matmul %129, %130, %cst_40 {dimension_numbers = #tpu.dot_dimension_numbers<[1], [0], [0], [1], [0, 0, 1, 1], [], []>} : vector<32x16xbf16>, vector<16x32xbf16>, vector<32x32xf32> -> vector<32x32xf32>
    %132 = arith.addf %125, %131 : vector<32x32xf32>
    %c30_i32_41 = arith.constant 30 : i32
    %133 = tpu.dynamic_rotate %108 by %c30_i32_41 dim 0 : vector<32x16xf32>, i32 -> vector<32x16xf32>
    %134 = vector.broadcast %30 : vector<32x1xf32> to vector<32x16xf32>
    %135 = arith.mulf %133, %134 : vector<32x16xf32>
    %136 = arith.truncf %135 : vector<32x16xf32> to vector<32x16xbf16>
    %c144 = arith.constant 144 : index
    %c0_42 = arith.constant 0 : index
    %137 = vector.load %arg1[%c144, %c0_42] : memref<1120x128xbf16, #tpu.memory_space<vmem>>, vector<16x32xbf16>
    %cst_43 = arith.constant dense<0.000000e+00> : vector<32x32xf32>
    %138 = tpu.matmul %136, %137, %cst_43 {dimension_numbers = #tpu.dot_dimension_numbers<[1], [0], [0], [1], [0, 0, 1, 1], [], []>} : vector<32x16xbf16>, vector<16x32xbf16>, vector<32x32xf32> -> vector<32x32xf32>
    %139 = arith.addf %132, %138 : vector<32x32xf32>
    %c2 = arith.constant 2 : index
    %c0_44 = arith.constant 0 : index
    %140 = vector.load %arg2[%c2, %c0_44] : memref<16x128xf32, #tpu.memory_space<vmem>>, vector<1x32xf32>
    %141 = vector.broadcast %140 : vector<1x32xf32> to vector<32x32xf32>
    %142 = arith.addf %139, %141 : vector<32x32xf32>
    %cst_45 = arith.constant 0.000000e+00 : f32
    %143 = vector.broadcast %cst_45 : f32 to vector<32x32xf32>
    %144 = arith.maximumf %142, %143 : vector<32x32xf32>
    %c2_i32_46 = arith.constant 2 : i32
    %145 = tpu.dynamic_rotate %144 by %c2_i32_46 dim 0 : vector<32x32xf32>, i32 -> vector<32x32xf32>
    %146 = vector.broadcast %9 : vector<32x1xf32> to vector<32x32xf32>
    %147 = arith.mulf %145, %146 : vector<32x32xf32>
    %148 = arith.truncf %147 : vector<32x32xf32> to vector<32x32xbf16>
    %c160 = arith.constant 160 : index
    %c0_47 = arith.constant 0 : index
    %149 = vector.load %arg1[%c160, %c0_47] : memref<1120x128xbf16, #tpu.memory_space<vmem>>, vector<32x32xbf16>
    %cst_48 = arith.constant dense<0.000000e+00> : vector<32x32xf32>
    %150 = tpu.matmul %148, %149, %cst_48 {dimension_numbers = #tpu.dot_dimension_numbers<[1], [0], [0], [1], [0, 0, 1, 1], [], []>} : vector<32x32xbf16>, vector<32x32xbf16>, vector<32x32xf32> -> vector<32x32xf32>
    %c1_i32_49 = arith.constant 1 : i32
    %151 = tpu.dynamic_rotate %144 by %c1_i32_49 dim 0 : vector<32x32xf32>, i32 -> vector<32x32xf32>
    %152 = vector.broadcast %16 : vector<32x1xf32> to vector<32x32xf32>
    %153 = arith.mulf %151, %152 : vector<32x32xf32>
    %154 = arith.truncf %153 : vector<32x32xf32> to vector<32x32xbf16>
    %c192 = arith.constant 192 : index
    %c0_50 = arith.constant 0 : index
    %155 = vector.load %arg1[%c192, %c0_50] : memref<1120x128xbf16, #tpu.memory_space<vmem>>, vector<32x32xbf16>
    %cst_51 = arith.constant dense<0.000000e+00> : vector<32x32xf32>
    %156 = tpu.matmul %154, %155, %cst_51 {dimension_numbers = #tpu.dot_dimension_numbers<[1], [0], [0], [1], [0, 0, 1, 1], [], []>} : vector<32x32xbf16>, vector<32x32xbf16>, vector<32x32xf32> -> vector<32x32xf32>
    %157 = arith.addf %150, %156 : vector<32x32xf32>
    %158 = arith.truncf %144 : vector<32x32xf32> to vector<32x32xbf16>
    %c224 = arith.constant 224 : index
    %c0_52 = arith.constant 0 : index
    %159 = vector.load %arg1[%c224, %c0_52] : memref<1120x128xbf16, #tpu.memory_space<vmem>>, vector<32x32xbf16>
    %cst_53 = arith.constant dense<0.000000e+00> : vector<32x32xf32>
    %160 = tpu.matmul %158, %159, %cst_53 {dimension_numbers = #tpu.dot_dimension_numbers<[1], [0], [0], [1], [0, 0, 1, 1], [], []>} : vector<32x32xbf16>, vector<32x32xbf16>, vector<32x32xf32> -> vector<32x32xf32>
    %161 = arith.addf %157, %160 : vector<32x32xf32>
    %c31_i32_54 = arith.constant 31 : i32
    %162 = tpu.dynamic_rotate %144 by %c31_i32_54 dim 0 : vector<32x32xf32>, i32 -> vector<32x32xf32>
    %163 = vector.broadcast %23 : vector<32x1xf32> to vector<32x32xf32>
    %164 = arith.mulf %162, %163 : vector<32x32xf32>
    %165 = arith.truncf %164 : vector<32x32xf32> to vector<32x32xbf16>
    %c256 = arith.constant 256 : index
    %c0_55 = arith.constant 0 : index
    %166 = vector.load %arg1[%c256, %c0_55] : memref<1120x128xbf16, #tpu.memory_space<vmem>>, vector<32x32xbf16>
    %cst_56 = arith.constant dense<0.000000e+00> : vector<32x32xf32>
    %167 = tpu.matmul %165, %166, %cst_56 {dimension_numbers = #tpu.dot_dimension_numbers<[1], [0], [0], [1], [0, 0, 1, 1], [], []>} : vector<32x32xbf16>, vector<32x32xbf16>, vector<32x32xf32> -> vector<32x32xf32>
    %168 = arith.addf %161, %167 : vector<32x32xf32>
    %c30_i32_57 = arith.constant 30 : i32
    %169 = tpu.dynamic_rotate %144 by %c30_i32_57 dim 0 : vector<32x32xf32>, i32 -> vector<32x32xf32>
    %170 = vector.broadcast %30 : vector<32x1xf32> to vector<32x32xf32>
    %171 = arith.mulf %169, %170 : vector<32x32xf32>
    %172 = arith.truncf %171 : vector<32x32xf32> to vector<32x32xbf16>
    %c288 = arith.constant 288 : index
    %c0_58 = arith.constant 0 : index
    %173 = vector.load %arg1[%c288, %c0_58] : memref<1120x128xbf16, #tpu.memory_space<vmem>>, vector<32x32xbf16>
    %cst_59 = arith.constant dense<0.000000e+00> : vector<32x32xf32>
    %174 = tpu.matmul %172, %173, %cst_59 {dimension_numbers = #tpu.dot_dimension_numbers<[1], [0], [0], [1], [0, 0, 1, 1], [], []>} : vector<32x32xbf16>, vector<32x32xbf16>, vector<32x32xf32> -> vector<32x32xf32>
    %175 = arith.addf %168, %174 : vector<32x32xf32>
    %c3 = arith.constant 3 : index
    %c0_60 = arith.constant 0 : index
    %176 = vector.load %arg2[%c3, %c0_60] : memref<16x128xf32, #tpu.memory_space<vmem>>, vector<1x32xf32>
    %177 = vector.broadcast %176 : vector<1x32xf32> to vector<32x32xf32>
    %178 = arith.addf %175, %177 : vector<32x32xf32>
    %cst_61 = arith.constant 0.000000e+00 : f32
    %179 = vector.broadcast %cst_61 : f32 to vector<32x32xf32>
    %180 = arith.maximumf %178, %179 : vector<32x32xf32>
    %c2_i32_62 = arith.constant 2 : i32
    %181 = tpu.dynamic_rotate %180 by %c2_i32_62 dim 0 : vector<32x32xf32>, i32 -> vector<32x32xf32>
    %182 = vector.broadcast %9 : vector<32x1xf32> to vector<32x32xf32>
    %183 = arith.mulf %181, %182 : vector<32x32xf32>
    %184 = arith.truncf %183 : vector<32x32xf32> to vector<32x32xbf16>
    %c320 = arith.constant 320 : index
    %c0_63 = arith.constant 0 : index
    %185 = vector.load %arg1[%c320, %c0_63] : memref<1120x128xbf16, #tpu.memory_space<vmem>>, vector<32x32xbf16>
    %cst_64 = arith.constant dense<0.000000e+00> : vector<32x32xf32>
    %186 = tpu.matmul %184, %185, %cst_64 {dimension_numbers = #tpu.dot_dimension_numbers<[1], [0], [0], [1], [0, 0, 1, 1], [], []>} : vector<32x32xbf16>, vector<32x32xbf16>, vector<32x32xf32> -> vector<32x32xf32>
    %c1_i32_65 = arith.constant 1 : i32
    %187 = tpu.dynamic_rotate %180 by %c1_i32_65 dim 0 : vector<32x32xf32>, i32 -> vector<32x32xf32>
    %188 = vector.broadcast %16 : vector<32x1xf32> to vector<32x32xf32>
    %189 = arith.mulf %187, %188 : vector<32x32xf32>
    %190 = arith.truncf %189 : vector<32x32xf32> to vector<32x32xbf16>
    %c352 = arith.constant 352 : index
    %c0_66 = arith.constant 0 : index
    %191 = vector.load %arg1[%c352, %c0_66] : memref<1120x128xbf16, #tpu.memory_space<vmem>>, vector<32x32xbf16>
    %cst_67 = arith.constant dense<0.000000e+00> : vector<32x32xf32>
    %192 = tpu.matmul %190, %191, %cst_67 {dimension_numbers = #tpu.dot_dimension_numbers<[1], [0], [0], [1], [0, 0, 1, 1], [], []>} : vector<32x32xbf16>, vector<32x32xbf16>, vector<32x32xf32> -> vector<32x32xf32>
    %193 = arith.addf %186, %192 : vector<32x32xf32>
    %194 = arith.truncf %180 : vector<32x32xf32> to vector<32x32xbf16>
    %c384 = arith.constant 384 : index
    %c0_68 = arith.constant 0 : index
    %195 = vector.load %arg1[%c384, %c0_68] : memref<1120x128xbf16, #tpu.memory_space<vmem>>, vector<32x32xbf16>
    %cst_69 = arith.constant dense<0.000000e+00> : vector<32x32xf32>
    %196 = tpu.matmul %194, %195, %cst_69 {dimension_numbers = #tpu.dot_dimension_numbers<[1], [0], [0], [1], [0, 0, 1, 1], [], []>} : vector<32x32xbf16>, vector<32x32xbf16>, vector<32x32xf32> -> vector<32x32xf32>
    %197 = arith.addf %193, %196 : vector<32x32xf32>
    %c31_i32_70 = arith.constant 31 : i32
    %198 = tpu.dynamic_rotate %180 by %c31_i32_70 dim 0 : vector<32x32xf32>, i32 -> vector<32x32xf32>
    %199 = vector.broadcast %23 : vector<32x1xf32> to vector<32x32xf32>
    %200 = arith.mulf %198, %199 : vector<32x32xf32>
    %201 = arith.truncf %200 : vector<32x32xf32> to vector<32x32xbf16>
    %c416 = arith.constant 416 : index
    %c0_71 = arith.constant 0 : index
    %202 = vector.load %arg1[%c416, %c0_71] : memref<1120x128xbf16, #tpu.memory_space<vmem>>, vector<32x32xbf16>
    %cst_72 = arith.constant dense<0.000000e+00> : vector<32x32xf32>
    %203 = tpu.matmul %201, %202, %cst_72 {dimension_numbers = #tpu.dot_dimension_numbers<[1], [0], [0], [1], [0, 0, 1, 1], [], []>} : vector<32x32xbf16>, vector<32x32xbf16>, vector<32x32xf32> -> vector<32x32xf32>
    %204 = arith.addf %197, %203 : vector<32x32xf32>
    %c30_i32_73 = arith.constant 30 : i32
    %205 = tpu.dynamic_rotate %180 by %c30_i32_73 dim 0 : vector<32x32xf32>, i32 -> vector<32x32xf32>
    %206 = vector.broadcast %30 : vector<32x1xf32> to vector<32x32xf32>
    %207 = arith.mulf %205, %206 : vector<32x32xf32>
    %208 = arith.truncf %207 : vector<32x32xf32> to vector<32x32xbf16>
    %c448 = arith.constant 448 : index
    %c0_74 = arith.constant 0 : index
    %209 = vector.load %arg1[%c448, %c0_74] : memref<1120x128xbf16, #tpu.memory_space<vmem>>, vector<32x32xbf16>
    %cst_75 = arith.constant dense<0.000000e+00> : vector<32x32xf32>
    %210 = tpu.matmul %208, %209, %cst_75 {dimension_numbers = #tpu.dot_dimension_numbers<[1], [0], [0], [1], [0, 0, 1, 1], [], []>} : vector<32x32xbf16>, vector<32x32xbf16>, vector<32x32xf32> -> vector<32x32xf32>
    %211 = arith.addf %204, %210 : vector<32x32xf32>
    %c4 = arith.constant 4 : index
    %c0_76 = arith.constant 0 : index
    %212 = vector.load %arg2[%c4, %c0_76] : memref<16x128xf32, #tpu.memory_space<vmem>>, vector<1x32xf32>
    %213 = vector.broadcast %212 : vector<1x32xf32> to vector<32x32xf32>
    %214 = arith.addf %211, %213 : vector<32x32xf32>
    %cst_77 = arith.constant 0.000000e+00 : f32
    %215 = vector.broadcast %cst_77 : f32 to vector<32x32xf32>
    %216 = arith.maximumf %214, %215 : vector<32x32xf32>
    %c0_78 = arith.constant 0 : index
    %c0_79 = arith.constant 0 : index
    %217 = vector.load %arg4[%c0_78, %c0_79] : memref<32x32xf32, #tpu.memory_space<vmem>>, vector<32x32xf32>
    tpu.vector_store %arg4[%c0_78, %c0_79], %216 {strides = array<i32>} : memref<32x32xf32, #tpu.memory_space<vmem>>, vector<32x32xf32>,
    %c0_80 = arith.constant 0 : index
    %c0_81 = arith.constant 0 : index
    %218 = tpu.strided_load %arg4[%c0_80, %c0_81] {strides = array<i32: 16, 1>} : memref<32x32xf32, #tpu.memory_space<vmem>>, vector<2x32xf32>
    %219 = arith.truncf %218 : vector<2x32xf32> to vector<2x32xbf16>
    %c480 = arith.constant 480 : index
    %c0_82 = arith.constant 0 : index
    %220 = vector.load %arg1[%c480, %c0_82] : memref<1120x128xbf16, #tpu.memory_space<vmem>>, vector<32x128xbf16>
    %cst_83 = arith.constant dense<0.000000e+00> : vector<2x128xf32>
    %221 = tpu.matmul %219, %220, %cst_83 {dimension_numbers = #tpu.dot_dimension_numbers<[1], [0], [0], [1], [0, 0, 1, 1], [], []>} : vector<2x32xbf16>, vector<32x128xbf16>, vector<2x128xf32> -> vector<2x128xf32>
    %c1_84 = arith.constant 1 : index
    %c0_85 = arith.constant 0 : index
    %222 = tpu.strided_load %arg4[%c1_84, %c0_85] {strides = array<i32: 16, 1>} : memref<32x32xf32, #tpu.memory_space<vmem>>, vector<2x32xf32>
    %223 = arith.truncf %222 : vector<2x32xf32> to vector<2x32xbf16>
    %c512 = arith.constant 512 : index
    %c0_86 = arith.constant 0 : index
    %224 = vector.load %arg1[%c512, %c0_86] : memref<1120x128xbf16, #tpu.memory_space<vmem>>, vector<32x128xbf16>
    %cst_87 = arith.constant dense<0.000000e+00> : vector<2x128xf32>
    %225 = tpu.matmul %223, %224, %cst_87 {dimension_numbers = #tpu.dot_dimension_numbers<[1], [0], [0], [1], [0, 0, 1, 1], [], []>} : vector<2x32xbf16>, vector<32x128xbf16>, vector<2x128xf32> -> vector<2x128xf32>
    %226 = arith.addf %221, %225 : vector<2x128xf32>
    %c2_88 = arith.constant 2 : index
    %c0_89 = arith.constant 0 : index
    %227 = tpu.strided_load %arg4[%c2_88, %c0_89] {strides = array<i32: 16, 1>} : memref<32x32xf32, #tpu.memory_space<vmem>>, vector<2x32xf32>
    %228 = arith.truncf %227 : vector<2x32xf32> to vector<2x32xbf16>
    %c544 = arith.constant 544 : index
    %c0_90 = arith.constant 0 : index
    %229 = vector.load %arg1[%c544, %c0_90] : memref<1120x128xbf16, #tpu.memory_space<vmem>>, vector<32x128xbf16>
    %cst_91 = arith.constant dense<0.000000e+00> : vector<2x128xf32>
    %230 = tpu.matmul %228, %229, %cst_91 {dimension_numbers = #tpu.dot_dimension_numbers<[1], [0], [0], [1], [0, 0, 1, 1], [], []>} : vector<2x32xbf16>, vector<32x128xbf16>, vector<2x128xf32> -> vector<2x128xf32>
    %231 = arith.addf %226, %230 : vector<2x128xf32>
    %c3_92 = arith.constant 3 : index
    %c0_93 = arith.constant 0 : index
    %232 = tpu.strided_load %arg4[%c3_92, %c0_93] {strides = array<i32: 16, 1>} : memref<32x32xf32, #tpu.memory_space<vmem>>, vector<2x32xf32>
    %233 = arith.truncf %232 : vector<2x32xf32> to vector<2x32xbf16>
    %c576 = arith.constant 576 : index
    %c0_94 = arith.constant 0 : index
    %234 = vector.load %arg1[%c576, %c0_94] : memref<1120x128xbf16, #tpu.memory_space<vmem>>, vector<32x128xbf16>
    %cst_95 = arith.constant dense<0.000000e+00> : vector<2x128xf32>
    %235 = tpu.matmul %233, %234, %cst_95 {dimension_numbers = #tpu.dot_dimension_numbers<[1], [0], [0], [1], [0, 0, 1, 1], [], []>} : vector<2x32xbf16>, vector<32x128xbf16>, vector<2x128xf32> -> vector<2x128xf32>
    %236 = arith.addf %231, %235 : vector<2x128xf32>
    %c4_96 = arith.constant 4 : index
    %c0_97 = arith.constant 0 : index
    %237 = tpu.strided_load %arg4[%c4_96, %c0_97] {strides = array<i32: 16, 1>} : memref<32x32xf32, #tpu.memory_space<vmem>>, vector<2x32xf32>
    %238 = arith.truncf %237 : vector<2x32xf32> to vector<2x32xbf16>
    %c608 = arith.constant 608 : index
    %c0_98 = arith.constant 0 : index
    %239 = vector.load %arg1[%c608, %c0_98] : memref<1120x128xbf16, #tpu.memory_space<vmem>>, vector<32x128xbf16>
    %cst_99 = arith.constant dense<0.000000e+00> : vector<2x128xf32>
    %240 = tpu.matmul %238, %239, %cst_99 {dimension_numbers = #tpu.dot_dimension_numbers<[1], [0], [0], [1], [0, 0, 1, 1], [], []>} : vector<2x32xbf16>, vector<32x128xbf16>, vector<2x128xf32> -> vector<2x128xf32>
    %241 = arith.addf %236, %240 : vector<2x128xf32>
    %c5 = arith.constant 5 : index
    %c0_100 = arith.constant 0 : index
    %242 = tpu.strided_load %arg4[%c5, %c0_100] {strides = array<i32: 16, 1>} : memref<32x32xf32, #tpu.memory_space<vmem>>, vector<2x32xf32>
    %243 = arith.truncf %242 : vector<2x32xf32> to vector<2x32xbf16>
    %c640 = arith.constant 640 : index
    %c0_101 = arith.constant 0 : index
    %244 = vector.load %arg1[%c640, %c0_101] : memref<1120x128xbf16, #tpu.memory_space<vmem>>, vector<32x128xbf16>
    %cst_102 = arith.constant dense<0.000000e+00> : vector<2x128xf32>
    %245 = tpu.matmul %243, %244, %cst_102 {dimension_numbers = #tpu.dot_dimension_numbers<[1], [0], [0], [1], [0, 0, 1, 1], [], []>} : vector<2x32xbf16>, vector<32x128xbf16>, vector<2x128xf32> -> vector<2x128xf32>
    %246 = arith.addf %241, %245 : vector<2x128xf32>
    %c6 = arith.constant 6 : index
    %c0_103 = arith.constant 0 : index
    %247 = tpu.strided_load %arg4[%c6, %c0_103] {strides = array<i32: 16, 1>} : memref<32x32xf32, #tpu.memory_space<vmem>>, vector<2x32xf32>
    %248 = arith.truncf %247 : vector<2x32xf32> to vector<2x32xbf16>
    %c672 = arith.constant 672 : index
    %c0_104 = arith.constant 0 : index
    %249 = vector.load %arg1[%c672, %c0_104] : memref<1120x128xbf16, #tpu.memory_space<vmem>>, vector<32x128xbf16>
    %cst_105 = arith.constant dense<0.000000e+00> : vector<2x128xf32>
    %250 = tpu.matmul %248, %249, %cst_105 {dimension_numbers = #tpu.dot_dimension_numbers<[1], [0], [0], [1], [0, 0, 1, 1], [], []>} : vector<2x32xbf16>, vector<32x128xbf16>, vector<2x128xf32> -> vector<2x128xf32>
    %251 = arith.addf %246, %250 : vector<2x128xf32>
    %c7 = arith.constant 7 : index
    %c0_106 = arith.constant 0 : index
    %252 = tpu.strided_load %arg4[%c7, %c0_106] {strides = array<i32: 16, 1>} : memref<32x32xf32, #tpu.memory_space<vmem>>, vector<2x32xf32>
    %253 = arith.truncf %252 : vector<2x32xf32> to vector<2x32xbf16>
    %c704 = arith.constant 704 : index
    %c0_107 = arith.constant 0 : index
    %254 = vector.load %arg1[%c704, %c0_107] : memref<1120x128xbf16, #tpu.memory_space<vmem>>, vector<32x128xbf16>
    %cst_108 = arith.constant dense<0.000000e+00> : vector<2x128xf32>
    %255 = tpu.matmul %253, %254, %cst_108 {dimension_numbers = #tpu.dot_dimension_numbers<[1], [0], [0], [1], [0, 0, 1, 1], [], []>} : vector<2x32xbf16>, vector<32x128xbf16>, vector<2x128xf32> -> vector<2x128xf32>
    %256 = arith.addf %251, %255 : vector<2x128xf32>
    %c8_109 = arith.constant 8 : index
    %c0_110 = arith.constant 0 : index
    %257 = tpu.strided_load %arg4[%c8_109, %c0_110] {strides = array<i32: 16, 1>} : memref<32x32xf32, #tpu.memory_space<vmem>>, vector<2x32xf32>
    %258 = arith.truncf %257 : vector<2x32xf32> to vector<2x32xbf16>
    %c736 = arith.constant 736 : index
    %c0_111 = arith.constant 0 : index
    %259 = vector.load %arg1[%c736, %c0_111] : memref<1120x128xbf16, #tpu.memory_space<vmem>>, vector<32x128xbf16>
    %cst_112 = arith.constant dense<0.000000e+00> : vector<2x128xf32>
    %260 = tpu.matmul %258, %259, %cst_112 {dimension_numbers = #tpu.dot_dimension_numbers<[1], [0], [0], [1], [0, 0, 1, 1], [], []>} : vector<2x32xbf16>, vector<32x128xbf16>, vector<2x128xf32> -> vector<2x128xf32>
    %261 = arith.addf %256, %260 : vector<2x128xf32>
    %c9_113 = arith.constant 9 : index
    %c0_114 = arith.constant 0 : index
    %262 = tpu.strided_load %arg4[%c9_113, %c0_114] {strides = array<i32: 16, 1>} : memref<32x32xf32, #tpu.memory_space<vmem>>, vector<2x32xf32>
    %263 = arith.truncf %262 : vector<2x32xf32> to vector<2x32xbf16>
    %c768 = arith.constant 768 : index
    %c0_115 = arith.constant 0 : index
    %264 = vector.load %arg1[%c768, %c0_115] : memref<1120x128xbf16, #tpu.memory_space<vmem>>, vector<32x128xbf16>
    %cst_116 = arith.constant dense<0.000000e+00> : vector<2x128xf32>
    %265 = tpu.matmul %263, %264, %cst_116 {dimension_numbers = #tpu.dot_dimension_numbers<[1], [0], [0], [1], [0, 0, 1, 1], [], []>} : vector<2x32xbf16>, vector<32x128xbf16>, vector<2x128xf32> -> vector<2x128xf32>
    %266 = arith.addf %261, %265 : vector<2x128xf32>
    %c10_117 = arith.constant 10 : index
    %c0_118 = arith.constant 0 : index
    %267 = tpu.strided_load %arg4[%c10_117, %c0_118] {strides = array<i32: 16, 1>} : memref<32x32xf32, #tpu.memory_space<vmem>>, vector<2x32xf32>
    %268 = arith.truncf %267 : vector<2x32xf32> to vector<2x32xbf16>
    %c800 = arith.constant 800 : index
    %c0_119 = arith.constant 0 : index
    %269 = vector.load %arg1[%c800, %c0_119] : memref<1120x128xbf16, #tpu.memory_space<vmem>>, vector<32x128xbf16>
    %cst_120 = arith.constant dense<0.000000e+00> : vector<2x128xf32>
    %270 = tpu.matmul %268, %269, %cst_120 {dimension_numbers = #tpu.dot_dimension_numbers<[1], [0], [0], [1], [0, 0, 1, 1], [], []>} : vector<2x32xbf16>, vector<32x128xbf16>, vector<2x128xf32> -> vector<2x128xf32>
    %271 = arith.addf %266, %270 : vector<2x128xf32>
    %c11_121 = arith.constant 11 : index
    %c0_122 = arith.constant 0 : index
    %272 = tpu.strided_load %arg4[%c11_121, %c0_122] {strides = array<i32: 16, 1>} : memref<32x32xf32, #tpu.memory_space<vmem>>, vector<2x32xf32>
    %273 = arith.truncf %272 : vector<2x32xf32> to vector<2x32xbf16>
    %c832 = arith.constant 832 : index
    %c0_123 = arith.constant 0 : index
    %274 = vector.load %arg1[%c832, %c0_123] : memref<1120x128xbf16, #tpu.memory_space<vmem>>, vector<32x128xbf16>
    %cst_124 = arith.constant dense<0.000000e+00> : vector<2x128xf32>
    %275 = tpu.matmul %273, %274, %cst_124 {dimension_numbers = #tpu.dot_dimension_numbers<[1], [0], [0], [1], [0, 0, 1, 1], [], []>} : vector<2x32xbf16>, vector<32x128xbf16>, vector<2x128xf32> -> vector<2x128xf32>
    %276 = arith.addf %271, %275 : vector<2x128xf32>
    %c12_125 = arith.constant 12 : index
    %c0_126 = arith.constant 0 : index
    %277 = tpu.strided_load %arg4[%c12_125, %c0_126] {strides = array<i32: 16, 1>} : memref<32x32xf32, #tpu.memory_space<vmem>>, vector<2x32xf32>
    %278 = arith.truncf %277 : vector<2x32xf32> to vector<2x32xbf16>
    %c864 = arith.constant 864 : index
    %c0_127 = arith.constant 0 : index
    %279 = vector.load %arg1[%c864, %c0_127] : memref<1120x128xbf16, #tpu.memory_space<vmem>>, vector<32x128xbf16>
    %cst_128 = arith.constant dense<0.000000e+00> : vector<2x128xf32>
    %280 = tpu.matmul %278, %279, %cst_128 {dimension_numbers = #tpu.dot_dimension_numbers<[1], [0], [0], [1], [0, 0, 1, 1], [], []>} : vector<2x32xbf16>, vector<32x128xbf16>, vector<2x128xf32> -> vector<2x128xf32>
    %281 = arith.addf %276, %280 : vector<2x128xf32>
    %c13 = arith.constant 13 : index
    %c0_129 = arith.constant 0 : index
    %282 = tpu.strided_load %arg4[%c13, %c0_129] {strides = array<i32: 16, 1>} : memref<32x32xf32, #tpu.memory_space<vmem>>, vector<2x32xf32>
    %283 = arith.truncf %282 : vector<2x32xf32> to vector<2x32xbf16>
    %c896 = arith.constant 896 : index
    %c0_130 = arith.constant 0 : index
    %284 = vector.load %arg1[%c896, %c0_130] : memref<1120x128xbf16, #tpu.memory_space<vmem>>, vector<32x128xbf16>
    %cst_131 = arith.constant dense<0.000000e+00> : vector<2x128xf32>
    %285 = tpu.matmul %283, %284, %cst_131 {dimension_numbers = #tpu.dot_dimension_numbers<[1], [0], [0], [1], [0, 0, 1, 1], [], []>} : vector<2x32xbf16>, vector<32x128xbf16>, vector<2x128xf32> -> vector<2x128xf32>
    %286 = arith.addf %281, %285 : vector<2x128xf32>
    %c14 = arith.constant 14 : index
    %c0_132 = arith.constant 0 : index
    %287 = tpu.strided_load %arg4[%c14, %c0_132] {strides = array<i32: 16, 1>} : memref<32x32xf32, #tpu.memory_space<vmem>>, vector<2x32xf32>
    %288 = arith.truncf %287 : vector<2x32xf32> to vector<2x32xbf16>
    %c928 = arith.constant 928 : index
    %c0_133 = arith.constant 0 : index
    %289 = vector.load %arg1[%c928, %c0_133] : memref<1120x128xbf16, #tpu.memory_space<vmem>>, vector<32x128xbf16>
    %cst_134 = arith.constant dense<0.000000e+00> : vector<2x128xf32>
    %290 = tpu.matmul %288, %289, %cst_134 {dimension_numbers = #tpu.dot_dimension_numbers<[1], [0], [0], [1], [0, 0, 1, 1], [], []>} : vector<2x32xbf16>, vector<32x128xbf16>, vector<2x128xf32> -> vector<2x128xf32>
    %291 = arith.addf %286, %290 : vector<2x128xf32>
    %c15 = arith.constant 15 : index
    %c0_135 = arith.constant 0 : index
    %292 = tpu.strided_load %arg4[%c15, %c0_135] {strides = array<i32: 16, 1>} : memref<32x32xf32, #tpu.memory_space<vmem>>, vector<2x32xf32>
    %293 = arith.truncf %292 : vector<2x32xf32> to vector<2x32xbf16>
    %c960 = arith.constant 960 : index
    %c0_136 = arith.constant 0 : index
    %294 = vector.load %arg1[%c960, %c0_136] : memref<1120x128xbf16, #tpu.memory_space<vmem>>, vector<32x128xbf16>
    %cst_137 = arith.constant dense<0.000000e+00> : vector<2x128xf32>
    %295 = tpu.matmul %293, %294, %cst_137 {dimension_numbers = #tpu.dot_dimension_numbers<[1], [0], [0], [1], [0, 0, 1, 1], [], []>} : vector<2x32xbf16>, vector<32x128xbf16>, vector<2x128xf32> -> vector<2x128xf32>
    %296 = arith.addf %291, %295 : vector<2x128xf32>
    %c5_138 = arith.constant 5 : index
    %c0_139 = arith.constant 0 : index
    %297 = vector.load %arg2[%c5_138, %c0_139] : memref<16x128xf32, #tpu.memory_space<vmem>>, vector<1x128xf32>
    %298 = vector.broadcast %297 : vector<1x128xf32> to vector<2x128xf32>
    %299 = arith.addf %296, %298 : vector<2x128xf32>
    %cst_140 = arith.constant 0.000000e+00 : f32
    %300 = vector.broadcast %cst_140 : f32 to vector<2x128xf32>
    %301 = arith.maximumf %299, %300 : vector<2x128xf32>
    %302 = arith.truncf %301 : vector<2x128xf32> to vector<2x128xbf16>
    %c992 = arith.constant 992 : index
    %c0_141 = arith.constant 0 : index
    %303 = vector.load %arg1[%c992, %c0_141] : memref<1120x128xbf16, #tpu.memory_space<vmem>>, vector<128x8xbf16>
    %cst_142 = arith.constant dense<0.000000e+00> : vector<2x8xf32>
    %304 = tpu.matmul %302, %303, %cst_142 {dimension_numbers = #tpu.dot_dimension_numbers<[1], [0], [0], [1], [0, 0, 1, 1], [], []>} : vector<2x128xbf16>, vector<128x8xbf16>, vector<2x8xf32> -> vector<2x8xf32>
    %c6_143 = arith.constant 6 : index
    %c0_144 = arith.constant 0 : index
    %305 = vector.load %arg2[%c6_143, %c0_144] : memref<16x128xf32, #tpu.memory_space<vmem>>, vector<1x8xf32>
    %306 = vector.broadcast %305 : vector<1x8xf32> to vector<2x8xf32>
    %307 = arith.addf %304, %306 : vector<2x8xf32>
    %c0_145 = arith.constant 0 : index
    %c0_146 = arith.constant 0 : index
    %308 = vector.load %arg3[%c0_145, %c0_146] : memref<2x8xf32, #tpu.memory_space<vmem>>, vector<2x8xf32>
    tpu.vector_store %arg3[%c0_145, %c0_146], %307 {strides = array<i32>} : memref<2x8xf32, #tpu.memory_space<vmem>>, vector<2x8xf32>,
    return
  }
}

</mosaic_0001>

<llo_original>
// kernel: encoder_conv_forward.1
$region0: #{encoder_conv_forward.1}
  #allocation0 [shape = 'u32[]', space=smem, size = 0x4, offset = 0x4, fixed_abs, tag = 'smem constant byte address 0x4 - core index']
  #allocation1 [shape = 'u32[72,128]{1,0:T(1,128)}', space=vmem, size = 0x9000, scoped, tag = 'internal scratch']
  #allocation2 [shape = 'f32[32,32]{1,0:T(8,128)}', space=vmem, size = 0x4000, scoped, tag = 'scratch operand']
  %s0 = inlined_call_operand.vmem [shape: f32[32,1], index: 0, kind: input, shape index: {}]
  %s1 = inlined_call_operand.hbm [shape: bf16[1120,128], index: 1, kind: input, shape index: {}]
  %s2 = inlined_call_operand.vmem [shape: f32[16,128], index: 2, kind: input, shape index: {}]
  %s3 = inlined_call_operand.hbm [shape: f32[2,8], index: 3, kind: output, shape index: {}]
  %s4 = sld [smem:[#allocation0]]
  $region26: #{encoder_conv_forward.1} parent=0
    _
  %s6 = ssub.s32 1, %s4
  %s7 = scalar_select 0, %s6, %s4
  $region1: #{encoder_conv_forward.1} parent=0
    #allocation3 [shape = 'u8[286720]{0}', space=vmem, size = 0x46000, scoped, tag = 'input window, operand 1, single buffered']
    #allocation4 [shape = 's32[1]{0}', space=sflag, size = 0x4, scoped, tag = 'scoped memory for encoder_conv_forward.1']
    #allocation5 [shape = 's32[1]{0}', space=sflag, size = 0x4, scoped, tag = 'scoped memory for encoder_conv_forward.1']
    #allocation6 [shape = 'u8[1024]{0}', space=vmem, size = 0x400, scoped, tag = 'output window, operand 0, single buffered']
    %8 = vsyncpa [#allocation4], 0
    %9 = vsyncpa [#allocation5], 0
    // Predicated region
    $region2: #{encoder_conv_forward.1} parent=1 // pred_check
      _
    $region3: #{encoder_conv_forward.1} parent=1 // pred_check_branch
      %11 = sbr.rel (0) target = $region5
    $region4: #{encoder_conv_forward.1} parent=1 // pred_region
      _
    $region5: #{encoder_conv_forward.1} parent=1 // pred_fallthru
      _
    // Predicated region
    $region6: #{encoder_conv_forward.1} parent=1 // pred_check
      _
    $region7: #{encoder_conv_forward.1} parent=1 // pred_check_branch
      %13 = sbr.rel (0) target = $region9
    $region8: #{encoder_conv_forward.1} parent=1 // pred_region
      %15 = vsyncadd [#allocation4], 0
      %s16 = sshll.u32 %s1, 4
      %s17 = int_to_ptr.hbm [resolvable:$true] %s16
      %s18 = sshll.u32 [#allocation3], 4
      %s19 = int_to_ptr.vmem [resolvable:$true] %s18
      %24 = dma.hbm_to_vmem [thread:$0]  %s17, 8960, %s19, [#allocation4], 64, 64, 4
    $region9: #{encoder_conv_forward.1} parent=1 // pred_fallthru
      _
    // Predicated region
    $region10: #{encoder_conv_forward.1} parent=1 // pred_check
      _
    $region11: #{encoder_conv_forward.1} parent=1 // pred_check_branch
      %26 = sbr.rel (0) target = $region13
    $region12: #{encoder_conv_forward.1} parent=1 // pred_region
      _
    $region13: #{encoder_conv_forward.1} parent=1 // pred_fallthru
      _
    // Predicated region
    $region14: #{encoder_conv_forward.1} parent=1 // pred_check
      _
    $region15: #{encoder_conv_forward.1} parent=1 // pred_check_branch
      %28 = sbr.rel (0) target = $region17
    $region16: #{encoder_conv_forward.1} parent=1 // pred_region
      %30 = dma.done [#allocation4], 8960
    $region17: #{encoder_conv_forward.1} parent=1 // pred_fallthru
      _
    %v32 = vlaneseq
    %v33 = vshrl.u32 %v32, 7
    %v34 = vadd.s32 %v33, 8
    %v35 = vadd.s32 %v33, 16
    %v36 = vadd.s32 %v33, 24
    %v37 = vand.u32 %v33, 15
    %v38 = vand.u32 %v34, 15
    %v39 = vand.u32 %v35, 15
    %v40 = vand.u32 %v36, 15
    %vm41 = vcmp.ge.s32.totalorder %v37, 2
    %vm42 = vcmp.ge.s32.totalorder %v38, 2
    %vm43 = vcmp.ge.s32.totalorder %v39, 2
    %vm44 = vcmp.ge.s32.totalorder %v40, 2
    %vm45 = vcmp.lt.s32.totalorder %v37, 16
    %vm46 = vcmp.lt.s32.totalorder %v38, 16
    %vm47 = vcmp.lt.s32.totalorder %v39, 16
    %vm48 = vcmp.lt.s32.totalorder %v40, 16
    %vm49 = vmand %vm41, %vm45
    %vm50 = vmand %vm42, %vm46
    %vm51 = vmand %vm43, %vm47
    %vm52 = vmand %vm44, %vm48
    %v53 = vsel %vm49, 1, 0
    %v54 = vsel %vm50, 1, 0
    %v55 = vsel %vm51, 1, 0
    %v56 = vsel %vm52, 1, 0
    %v57 = vcvt.s32.f32 %v53
    %v58 = vcvt.s32.f32 %v54
    %v59 = vcvt.s32.f32 %v55
    %v60 = vcvt.s32.f32 %v56
    %vm61 = vcmp.ge.s32.totalorder %v37, 1
    %vm62 = vcmp.ge.s32.totalorder %v38, 1
    %vm63 = vcmp.ge.s32.totalorder %v39, 1
    %vm64 = vcmp.ge.s32.totalorder %v40, 1
    %vm65 = vmand %vm61, %vm45
    %vm66 = vmand %vm62, %vm46
    %vm67 = vmand %vm63, %vm47
    %vm68 = vmand %vm64, %vm48
    %v69 = vsel %vm65, 1, 0
    %v70 = vsel %vm66, 1, 0
    %v71 = vsel %vm67, 1, 0
    %v72 = vsel %vm68, 1, 0
    %v73 = vcvt.s32.f32 %v69
    %v74 = vcvt.s32.f32 %v70
    %v75 = vcvt.s32.f32 %v71
    %v76 = vcvt.s32.f32 %v72
    %vm77 = vcmp.ge.s32.totalorder %v37, 0
    %vm78 = vcmp.ge.s32.totalorder %v38, 0
    %vm79 = vcmp.ge.s32.totalorder %v39, 0
    %vm80 = vcmp.ge.s32.totalorder %v40, 0
    %vm81 = vcmp.lt.s32.totalorder %v37, 15
    %vm82 = vcmp.lt.s32.totalorder %v38, 15
    %vm83 = vcmp.lt.s32.totalorder %v39, 15
    %vm84 = vcmp.lt.s32.totalorder %v40, 15
    %vm85 = vmand %vm77, %vm81
    %vm86 = vmand %vm78, %vm82
    %vm87 = vmand %vm79, %vm83
    %vm88 = vmand %vm80, %vm84
    %v89 = vsel %vm85, 1, 0
    %v90 = vsel %vm86, 1, 0
    %v91 = vsel %vm87, 1, 0
    %v92 = vsel %vm88, 1, 0
    %v93 = vcvt.s32.f32 %v89
    %v94 = vcvt.s32.f32 %v90
    %v95 = vcvt.s32.f32 %v91
    %v96 = vcvt.s32.f32 %v92
    %vm97 = vcmp.lt.s32.totalorder %v37, 14
    %vm98 = vcmp.lt.s32.totalorder %v38, 14
    %vm99 = vcmp.lt.s32.totalorder %v39, 14
    %vm100 = vcmp.lt.s32.totalorder %v40, 14
    %vm101 = vmand %vm77, %vm97
    %vm102 = vmand %vm78, %vm98
    %vm103 = vmand %vm79, %vm99
    %vm104 = vmand %vm80, %vm100
    %v105 = vsel %vm101, 1, 0
    %v106 = vsel %vm102, 1, 0
    %v107 = vsel %vm103, 1, 0
    %v108 = vsel %vm104, 1, 0
    %v109 = vcvt.s32.f32 %v105
    %v110 = vcvt.s32.f32 %v106
    %v111 = vcvt.s32.f32 %v107
    %v112 = vcvt.s32.f32 %v108
    %v113 = vld [vmem:[%s0] sm:$0xff]
    %v114 = vld [vmem:[%s0 + $0x8] sm:$0xff]
    %v115 = vld [vmem:[%s0 + $0x10] sm:$0xff]
    %v116 = vld [vmem:[%s0 + $0x18] sm:$0xff]
    %v117 = vld [vmem:[%s2 + $0x8] sm:$0x1]
    %119 = vset.pattern.permute.xlu0 0
    %120 = vperm.xlu0 %119, %v113
    %v121 = vpop.permute.xlu0 %120
    %124 = vset.pattern.permute.xlu0 0
    %125 = vperm.xlu0 %124, %v114
    %v126 = vpop.permute.xlu0 %125
    %129 = vset.pattern.permute.xlu0 0
    %130 = vperm.xlu0 %129, %v115
    %v131 = vpop.permute.xlu0 %130
    %134 = vset.pattern.permute.xlu0 0
    %135 = vperm.xlu0 %134, %v116
    %v136 = vpop.permute.xlu0 %135
    %v138 = vperm.slane %v117, 0
    %v139 = vmul.f32 %v121, %v138
    %v140 = vmul.f32 %v126, %v138
    %v141 = vmul.f32 %v131, %v138
    %v142 = vmul.f32 %v136, %v138
    %v143 = vrot.slane %v139, 6
    %v144 = vrot.slane %v140, 6
    %v145 = vrot.slane %v141, 6
    %v146 = vrot.slane %v142, 6
    %vm147 = vcmp.lt.s32.totalorder %v33, 2
    %v148 = vsel %vm147, %v145, %v146
    %v149 = vsel %vm147, %v144, %v145
    %v150 = vsel %vm147, %v143, %v144
    %v151 = vsel %vm147, %v146, %v143
    %v152 = vmul.f32 %v151, %v57
    %v153 = vmul.f32 %v150, %v58
    %v154 = vmul.f32 %v149, %v59
    %v155 = vmul.f32 %v148, %v60
    %v156 = vld [vmem:[%s2 + $0x9] sm:$0x1]
    %v157 = vperm.slane %v156, 0
    %v158 = vmul.f32 %v121, %v157
    %v159 = vmul.f32 %v126, %v157
    %v160 = vmul.f32 %v131, %v157
    %v161 = vmul.f32 %v136, %v157
    %v162 = vrot.slane %v158, 7
    %v163 = vrot.slane %v159, 7
    %v164 = vrot.slane %v160, 7
    %v165 = vrot.slane %v161, 7
    %vm166 = vcmp.lt.s32.totalorder %v33, 1
    %v167 = vsel %vm166, %v164, %v165
    %v168 = vsel %vm166, %v163, %v164
    %v169 = vsel %vm166, %v162, %v163
    %v170 = vsel %vm166, %v165, %v162
    %v171 = vmul.f32 %v170, %v73
    %v172 = vmul.f32 %v169, %v74
    %v173 = vmul.f32 %v168, %v75
    %v174 = vmul.f32 %v167, %v76
    %v175 = vadd.f32 %v152, %v171
    %v176 = vadd.f32 %v153, %v172
    %v177 = vadd.f32 %v154, %v173
    %v178 = vadd.f32 %v155, %v174
    %v179 = vld [vmem:[%s2 + $0xa] sm:$0x1]
    %v180 = vperm.slane %v179, 0
    %v181 = vmul.f32 %v121, %v180
    %v182 = vmul.f32 %v126, %v180
    %v183 = vmul.f32 %v131, %v180
    %v184 = vmul.f32 %v136, %v180
    %v185 = vadd.f32 %v175, %v181
    %v186 = vadd.f32 %v176, %v182
    %v187 = vadd.f32 %v177, %v183
    %v188 = vadd.f32 %v178, %v184
    %v189 = vld [vmem:[%s2 + $0xb] sm:$0x1]
    %v190 = vperm.slane %v189, 0
    %v191 = vmul.f32 %v121, %v190
    %v192 = vmul.f32 %v126, %v190
    %v193 = vmul.f32 %v131, %v190
    %v194 = vmul.f32 %v136, %v190
    %v195 = vrot.slane %v191, 1
    %v196 = vrot.slane %v192, 1
    %v197 = vrot.slane %v193, 1
    %v198 = vrot.slane %v194, 1
    %vm199 = vcmp.lt.s32.totalorder %v33, 7
    %v200 = vsel %vm199, %v197, %v198
    %v201 = vsel %vm199, %v196, %v197
    %v202 = vsel %vm199, %v195, %v196
    %v203 = vsel %vm199, %v198, %v195
    %v204 = vmul.f32 %v202, %v93
    %v205 = vmul.f32 %v201, %v94
    %v206 = vmul.f32 %v200, %v95
    %v207 = vmul.f32 %v203, %v96
    %v208 = vadd.f32 %v185, %v204
    %v209 = vadd.f32 %v186, %v205
    %v210 = vadd.f32 %v187, %v206
    %v211 = vadd.f32 %v188, %v207
    %v212 = vld [vmem:[%s2 + $0xc] sm:$0x1]
    %v213 = vperm.slane %v212, 0
    %v214 = vmul.f32 %v121, %v213
    %v215 = vmul.f32 %v126, %v213
    %v216 = vmul.f32 %v131, %v213
    %v217 = vmul.f32 %v136, %v213
    %v218 = vrot.slane %v214, 2
    %v219 = vrot.slane %v215, 2
    %v220 = vrot.slane %v216, 2
    %v221 = vrot.slane %v217, 2
    %vm222 = vcmp.lt.s32.totalorder %v33, 6
    %v223 = vsel %vm222, %v220, %v221
    %v224 = vsel %vm222, %v219, %v220
    %v225 = vsel %vm222, %v218, %v219
    %v226 = vsel %vm222, %v221, %v218
    %v227 = vmul.f32 %v225, %v109
    %v228 = vmul.f32 %v224, %v110
    %v229 = vmul.f32 %v223, %v111
    %v230 = vmul.f32 %v226, %v112
    %v231 = vadd.f32 %v208, %v227
    %v232 = vadd.f32 %v209, %v228
    %v233 = vadd.f32 %v210, %v229
    %v234 = vadd.f32 %v211, %v230
    %v235 = vld [vmem:[%s2] sm:$0x1]
    %v236 = vperm.slane %v235, 0
    %v237 = vadd.f32 %v231, %v236
    %v238 = vadd.f32 %v232, %v236
    %v239 = vadd.f32 %v233, %v236
    %v240 = vadd.f32 %v234, %v236
    %v241 = vmax.f32 %v237, 0.0
    %v242 = vmax.f32 %v238, 0.0
    %v243 = vmax.f32 %v239, 0.0
    %v244 = vmax.f32 %v240, 0.0
    %v245 = vrot.slane %v241, 6
    %v246 = vrot.slane %v242, 6
    %v247 = vrot.slane %v243, 6
    %v248 = vrot.slane %v244, 6
    %v249 = vsel %vm147, %v247, %v248
    %v250 = vsel %vm147, %v246, %v247
    %v251 = vsel %vm147, %v245, %v246
    %v252 = vsel %vm147, %v248, %v245
    %v253 = vmul.f32 %v252, %v57
    %v254 = vmul.f32 %v251, %v58
    %v255 = vmul.f32 %v250, %v59
    %v256 = vmul.f32 %v249, %v60
    %v257 = vpack.c.bf16 %v254, %v253
    %v258 = vpack.c.bf16 %v256, %v255
    %v259 = vld [vmem:[#allocation3] sm:$0xf]
    %v260 = vld [vmem:[#allocation3 + $0x4] sm:$0xf]
    %v261 = vrot.slane %v241, 7
    %v262 = vrot.slane %v242, 7
    %v263 = vrot.slane %v243, 7
    %v264 = vrot.slane %v244, 7
    %v265 = vsel %vm166, %v263, %v264
    %v266 = vsel %vm166, %v262, %v263
    %v267 = vsel %vm166, %v261, %v262
    %v268 = vsel %vm166, %v264, %v261
    %v269 = vmul.f32 %v268, %v73
    %v270 = vmul.f32 %v267, %v74
    %v271 = vmul.f32 %v266, %v75
    %v272 = vmul.f32 %v265, %v76
    %v273 = vpack.c.bf16 %v270, %v269
    %v274 = vpack.c.bf16 %v272, %v271
    %v275 = vld [vmem:[#allocation3 + $0x8] sm:$0xf]
    %v276 = vld [vmem:[#allocation3 + $0xc] sm:$0xf]
    %v279 = vunpack.c.l.b16 %v275
    %v280 = vunpack.c.l.b16 %v276
    %v281 = vpack.c.b16 %v280, %v279
    %vm283 = vcmask 130048
    %v285 = vsel %vm283, %v273, 0
    %v288 = vsel %vm283, %v274, 0
    %290 = vmatpush.bf16.msra.mxu0 0
    %291 = vmatpush.bf16.msra.mxu0 0
    %292 = vmatpush.bf16.msra.mxu0 0
    %293 = vmatpush.bf16.msra.mxu0 0
    %294 = vmatpush.bf16.msra.mxu0 0
    %295 = vmatpush.bf16.msra.mxu0 0
    %296 = vmatpush.bf16.msra.mxu0 0
    %297 = vmatpush.bf16.msra.mxu0 %v281
    %298 = vmatmul.bf16.gmra.mxu0 %v285
    %v299 = vpop.f32.mrf.mxu0
    %v300 = vadd.f32 0.0, %v299
    %v301 = vpop.f32.mrf.mxu0
    %v302 = vadd.f32 0.0, %v301
    %303 = vmatmul.bf16.gmra.mxu0 %v288
    %v304 = vpop.f32.mrf.mxu0
    %v305 = vadd.f32 0.0, %v304
    %v306 = vpop.f32.mrf.mxu0
    %v307 = vadd.f32 0.0, %v306
    %308 = vdwg.mxu0
    %v311 = vunpack.c.l.b16 %v259
    %v312 = vunpack.c.l.b16 %v260
    %v313 = vpack.c.b16 %v312, %v311
    %v316 = vsel %vm283, %v257, 0
    %v319 = vsel %vm283, %v258, 0
    %321 = vmatpush.bf16.msra.mxu0 0
    %322 = vmatpush.bf16.msra.mxu0 0
    %323 = vmatpush.bf16.msra.mxu0 0
    %324 = vmatpush.bf16.msra.mxu0 0
    %325 = vmatpush.bf16.msra.mxu0 0
    %326 = vmatpush.bf16.msra.mxu0 0
    %327 = vmatpush.bf16.msra.mxu0 0
    %328 = vmatpush.bf16.msra.mxu0 %v313
    %329 = vmatmul.bf16.gmra.mxu0 %v316
    %v330 = vpop.f32.mrf.mxu0
    %v331 = vadd.f32 %v300, %v330
    %v332 = vpop.f32.mrf.mxu0
    %v333 = vadd.f32 %v302, %v332
    %334 = vmatmul.bf16.gmra.mxu0 %v319
    %v335 = vpop.f32.mrf.mxu0
    %v336 = vadd.f32 %v305, %v335
    %v337 = vpop.f32.mrf.mxu0
    %v338 = vadd.f32 %v307, %v337
    %339 = vdwg.mxu0
    %v340 = vpack.c.bf16 %v242, %v241
    %v341 = vpack.c.bf16 %v244, %v243
    %v342 = vld [vmem:[#allocation3 + $0x10] sm:$0xf]
    %v343 = vld [vmem:[#allocation3 + $0x14] sm:$0xf]
    %v346 = vunpack.c.l.b16 %v342
    %v347 = vunpack.c.l.b16 %v343
    %v348 = vpack.c.b16 %v347, %v346
    %v351 = vsel %vm283, %v340, 0
    %v354 = vsel %vm283, %v341, 0
    %356 = vmatpush.bf16.msra.mxu0 0
    %357 = vmatpush.bf16.msra.mxu0 0
    %358 = vmatpush.bf16.msra.mxu0 0
    %359 = vmatpush.bf16.msra.mxu0 0
    %360 = vmatpush.bf16.msra.mxu0 0
    %361 = vmatpush.bf16.msra.mxu0 0
    %362 = vmatpush.bf16.msra.mxu0 0
    %363 = vmatpush.bf16.msra.mxu0 %v348
    %364 = vmatmul.bf16.gmra.mxu0 %v351
    %v365 = vpop.f32.mrf.mxu0
    %v366 = vadd.f32 0.0, %v365
    %v367 = vpop.f32.mrf.mxu0
    %v368 = vadd.f32 0.0, %v367
    %369 = vmatmul.bf16.gmra.mxu0 %v354
    %v370 = vpop.f32.mrf.mxu0
    %v371 = vadd.f32 0.0, %v370
    %v372 = vpop.f32.mrf.mxu0
    %v373 = vadd.f32 0.0, %v372
    %374 = vdwg.mxu0
    %v375 = vadd.f32 %v331, %v366
    %v376 = vadd.f32 %v333, %v368
    %v377 = vadd.f32 %v336, %v371
    %v378 = vadd.f32 %v338, %v373
    %v379 = vrot.slane %v241, 1
    %v380 = vrot.slane %v242, 1
    %v381 = vrot.slane %v243, 1
    %v382 = vrot.slane %v244, 1
    %v383 = vsel %vm199, %v381, %v382
    %v384 = vsel %vm199, %v380, %v381
    %v385 = vsel %vm199, %v379, %v380
    %v386 = vsel %vm199, %v382, %v379
    %v387 = vmul.f32 %v385, %v93
    %v388 = vmul.f32 %v384, %v94
    %v389 = vmul.f32 %v383, %v95
    %v390 = vmul.f32 %v386, %v96
    %v391 = vpack.c.bf16 %v388, %v387
    %v392 = vpack.c.bf16 %v390, %v389
    %v393 = vld [vmem:[#allocation3 + $0x18] sm:$0xf]
    %v394 = vld [vmem:[#allocation3 + $0x1c] sm:$0xf]
    %v397 = vunpack.c.l.b16 %v393
    %v398 = vunpack.c.l.b16 %v394
    %v399 = vpack.c.b16 %v398, %v397
    %v402 = vsel %vm283, %v391, 0
    %v405 = vsel %vm283, %v392, 0
    %407 = vmatpush.bf16.msra.mxu0 0
    %408 = vmatpush.bf16.msra.mxu0 0
    %409 = vmatpush.bf16.msra.mxu0 0
    %410 = vmatpush.bf16.msra.mxu0 0
    %411 = vmatpush.bf16.msra.mxu0 0
    %412 = vmatpush.bf16.msra.mxu0 0
    %413 = vmatpush.bf16.msra.mxu0 0
    %414 = vmatpush.bf16.msra.mxu0 %v399
    %415 = vmatmul.bf16.gmra.mxu0 %v402
    %v416 = vpop.f32.mrf.mxu0
    %v417 = vadd.f32 0.0, %v416
    %v418 = vpop.f32.mrf.mxu0
    %v419 = vadd.f32 0.0, %v418
    %420 = vmatmul.bf16.gmra.mxu0 %v405
    %v421 = vpop.f32.mrf.mxu0
    %v422 = vadd.f32 0.0, %v421
    %v423 = vpop.f32.mrf.mxu0
    %v424 = vadd.f32 0.0, %v423
    %425 = vdwg.mxu0
    %v426 = vadd.f32 %v375, %v417
    %v427 = vadd.f32 %v376, %v419
    %v428 = vadd.f32 %v377, %v422
    %v429 = vadd.f32 %v378, %v424
    %v430 = vrot.slane %v241, 2
    %v431 = vrot.slane %v242, 2
    %v432 = vrot.slane %v243, 2
    %v433 = vrot.slane %v244, 2
    %v434 = vsel %vm222, %v432, %v433
    %v435 = vsel %vm222, %v431, %v432
    %v436 = vsel %vm222, %v430, %v431
    %v437 = vsel %vm222, %v433, %v430
    %v438 = vmul.f32 %v436, %v109
    %v439 = vmul.f32 %v435, %v110
    %v440 = vmul.f32 %v434, %v111
    %v441 = vmul.f32 %v437, %v112
    %v442 = vpack.c.bf16 %v439, %v438
    %v443 = vpack.c.bf16 %v441, %v440
    %v444 = vld [vmem:[#allocation3 + $0x20] sm:$0xf]
    %v445 = vld [vmem:[#allocation3 + $0x24] sm:$0xf]
    %v448 = vunpack.c.l.b16 %v444
    %v449 = vunpack.c.l.b16 %v445
    %v450 = vpack.c.b16 %v449, %v448
    %v453 = vsel %vm283, %v442, 0
    %v456 = vsel %vm283, %v443, 0
    %458 = vmatpush.bf16.msra.mxu0 0
    %459 = vmatpush.bf16.msra.mxu0 0
    %460 = vmatpush.bf16.msra.mxu0 0
    %461 = vmatpush.bf16.msra.mxu0 0
    %462 = vmatpush.bf16.msra.mxu0 0
    %463 = vmatpush.bf16.msra.mxu0 0
    %464 = vmatpush.bf16.msra.mxu0 0
    %465 = vmatpush.bf16.msra.mxu0 %v450
    %466 = vmatmul.bf16.gmra.mxu0 %v453
    %v467 = vpop.f32.mrf.mxu0
    %v468 = vadd.f32 0.0, %v467
    %v469 = vpop.f32.mrf.mxu0
    %v470 = vadd.f32 0.0, %v469
    %471 = vmatmul.bf16.gmra.mxu0 %v456
    %v472 = vpop.f32.mrf.mxu0
    %v473 = vadd.f32 0.0, %v472
    %v474 = vpop.f32.mrf.mxu0
    %v475 = vadd.f32 0.0, %v474
    %476 = vdwg.mxu0
    %v477 = vadd.f32 %v426, %v468
    %v478 = vadd.f32 %v427, %v470
    %v479 = vadd.f32 %v428, %v473
    %v480 = vadd.f32 %v429, %v475
    %v481 = vld [vmem:[%s2 + $0x1] sm:$0x1]
    %v482 = vperm.slane %v481, 0
    %v483 = vadd.f32 %v477, %v482
    %v484 = vadd.f32 %v478, %v482
    %v485 = vadd.f32 %v479, %v482
    %v486 = vadd.f32 %v480, %v482
    %v487 = vmax.f32 %v483, 0.0
    %v488 = vmax.f32 %v484, 0.0
    %v489 = vmax.f32 %v485, 0.0
    %v490 = vmax.f32 %v486, 0.0
    %v491 = vrot.slane %v487, 6
    %v492 = vrot.slane %v488, 6
    %v493 = vrot.slane %v489, 6
    %v494 = vrot.slane %v490, 6
    %v495 = vsel %vm147, %v493, %v494
    %v496 = vsel %vm147, %v492, %v493
    %v497 = vsel %vm147, %v491, %v492
    %v498 = vsel %vm147, %v494, %v491
    %v499 = vmul.f32 %v498, %v57
    %v500 = vmul.f32 %v497, %v58
    %v501 = vmul.f32 %v496, %v59
    %v502 = vmul.f32 %v495, %v60
    %v503 = vpack.c.bf16 %v500, %v499
    %v504 = vpack.c.bf16 %v502, %v501
    %v505 = vld [vmem:[#allocation3 + $0x28] sm:$0xf]
    %v506 = vld [vmem:[#allocation3 + $0x2c] sm:$0xf]
    %v507 = vrot.slane %v487, 7
    %v508 = vrot.slane %v488, 7
    %v509 = vrot.slane %v489, 7
    %v510 = vrot.slane %v490, 7
    %v511 = vsel %vm166, %v509, %v510
    %v512 = vsel %vm166, %v508, %v509
    %v513 = vsel %vm166, %v507, %v508
    %v514 = vsel %vm166, %v510, %v507
    %v515 = vmul.f32 %v514, %v73
    %v516 = vmul.f32 %v513, %v74
    %v517 = vmul.f32 %v512, %v75
    %v518 = vmul.f32 %v511, %v76
    %v519 = vpack.c.bf16 %v516, %v515
    %v520 = vpack.c.bf16 %v518, %v517
    %v521 = vld [vmem:[#allocation3 + $0x30] sm:$0xf]
    %v522 = vld [vmem:[#allocation3 + $0x34] sm:$0xf]
    %v525 = vunpack.c.l.b16 %v521
    %v526 = vunpack.c.l.b16 %v522
    %v527 = vpack.c.b16 %v526, %v525
    %v530 = vsel %vm283, %v519, 0
    %v533 = vsel %vm283, %v520, 0
    %535 = vmatpush.bf16.msra.mxu0 0
    %536 = vmatpush.bf16.msra.mxu0 0
    %537 = vmatpush.bf16.msra.mxu0 0
    %538 = vmatpush.bf16.msra.mxu0 0
    %539 = vmatpush.bf16.msra.mxu0 0
    %540 = vmatpush.bf16.msra.mxu0 0
    %541 = vmatpush.bf16.msra.mxu0 0
    %542 = vmatpush.bf16.msra.mxu0 %v527
    %543 = vmatmul.bf16.gmra.mxu0 %v530
    %v544 = vpop.f32.mrf.mxu0
    %v545 = vadd.f32 0.0, %v544
    %v546 = vpop.f32.mrf.mxu0
    %v547 = vadd.f32 0.0, %v546
    %548 = vmatmul.bf16.gmra.mxu0 %v533
    %v549 = vpop.f32.mrf.mxu0
    %v550 = vadd.f32 0.0, %v549
    %v551 = vpop.f32.mrf.mxu0
    %v552 = vadd.f32 0.0, %v551
    %553 = vdwg.mxu0
    %v556 = vunpack.c.l.b16 %v505
    %v557 = vunpack.c.l.b16 %v506
    %v558 = vpack.c.b16 %v557, %v556
    %v561 = vsel %vm283, %v503, 0
    %v564 = vsel %vm283, %v504, 0
    %566 = vmatpush.bf16.msra.mxu0 0
    %567 = vmatpush.bf16.msra.mxu0 0
    %568 = vmatpush.bf16.msra.mxu0 0
    %569 = vmatpush.bf16.msra.mxu0 0
    %570 = vmatpush.bf16.msra.mxu0 0
    %571 = vmatpush.bf16.msra.mxu0 0
    %572 = vmatpush.bf16.msra.mxu0 0
    %573 = vmatpush.bf16.msra.mxu0 %v558
    %574 = vmatmul.bf16.gmra.mxu0 %v561
    %v575 = vpop.f32.mrf.mxu0
    %v576 = vadd.f32 %v545, %v575
    %v577 = vpop.f32.mrf.mxu0
    %v578 = vadd.f32 %v547, %v577
    %579 = vmatmul.bf16.gmra.mxu0 %v564
    %v580 = vpop.f32.mrf.mxu0
    %v581 = vadd.f32 %v550, %v580
    %v582 = vpop.f32.mrf.mxu0
    %v583 = vadd.f32 %v552, %v582
    %584 = vdwg.mxu0
    %v585 = vpack.c.bf16 %v488, %v487
    %v586 = vpack.c.bf16 %v490, %v489
    %v587 = vld [vmem:[#allocation3 + $0x38] sm:$0xf]
    %v588 = vld [vmem:[#allocation3 + $0x3c] sm:$0xf]
    %v591 = vunpack.c.l.b16 %v587
    %v592 = vunpack.c.l.b16 %v588
    %v593 = vpack.c.b16 %v592, %v591
    %v596 = vsel %vm283, %v585, 0
    %v599 = vsel %vm283, %v586, 0
    %601 = vmatpush.bf16.msra.mxu0 0
    %602 = vmatpush.bf16.msra.mxu0 0
    %603 = vmatpush.bf16.msra.mxu0 0
    %604 = vmatpush.bf16.msra.mxu0 0
    %605 = vmatpush.bf16.msra.mxu0 0
    %606 = vmatpush.bf16.msra.mxu0 0
    %607 = vmatpush.bf16.msra.mxu0 0
    %608 = vmatpush.bf16.msra.mxu0 %v593
    %609 = vmatmul.bf16.gmra.mxu0 %v596
    %v610 = vpop.f32.mrf.mxu0
    %v611 = vadd.f32 0.0, %v610
    %v612 = vpop.f32.mrf.mxu0
    %v613 = vadd.f32 0.0, %v612
    %614 = vmatmul.bf16.gmra.mxu0 %v599
    %v615 = vpop.f32.mrf.mxu0
    %v616 = vadd.f32 0.0, %v615
    %v617 = vpop.f32.mrf.mxu0
    %v618 = vadd.f32 0.0, %v617
    %619 = vdwg.mxu0
    %v620 = vadd.f32 %v576, %v611
    %v621 = vadd.f32 %v578, %v613
    %v622 = vadd.f32 %v581, %v616
    %v623 = vadd.f32 %v583, %v618
    %v624 = vrot.slane %v487, 1
    %v625 = vrot.slane %v488, 1
    %v626 = vrot.slane %v489, 1
    %v627 = vrot.slane %v490, 1
    %v628 = vsel %vm199, %v626, %v627
    %v629 = vsel %vm199, %v625, %v626
    %v630 = vsel %vm199, %v624, %v625
    %v631 = vsel %vm199, %v627, %v624
    %v632 = vmul.f32 %v630, %v93
    %v633 = vmul.f32 %v629, %v94
    %v634 = vmul.f32 %v628, %v95
    %v635 = vmul.f32 %v631, %v96
    %v636 = vpack.c.bf16 %v633, %v632
    %v637 = vpack.c.bf16 %v635, %v634
    %v638 = vld [vmem:[#allocation3 + $0x40] sm:$0xf]
    %v639 = vld [vmem:[#allocation3 + $0x44] sm:$0xf]
    %v642 = vunpack.c.l.b16 %v638
    %v643 = vunpack.c.l.b16 %v639
    %v644 = vpack.c.b16 %v643, %v642
    %v647 = vsel %vm283, %v636, 0
    %v650 = vsel %vm283, %v637, 0
    %652 = vmatpush.bf16.msra.mxu0 0
    %653 = vmatpush.bf16.msra.mxu0 0
    %654 = vmatpush.bf16.msra.mxu0 0
    %655 = vmatpush.bf16.msra.mxu0 0
    %656 = vmatpush.bf16.msra.mxu0 0
    %657 = vmatpush.bf16.msra.mxu0 0
    %658 = vmatpush.bf16.msra.mxu0 0
    %659 = vmatpush.bf16.msra.mxu0 %v644
    %660 = vmatmul.bf16.gmra.mxu0 %v647
    %v661 = vpop.f32.mrf.mxu0
    %v662 = vadd.f32 0.0, %v661
    %v663 = vpop.f32.mrf.mxu0
    %v664 = vadd.f32 0.0, %v663
    %665 = vmatmul.bf16.gmra.mxu0 %v650
    %v666 = vpop.f32.mrf.mxu0
    %v667 = vadd.f32 0.0, %v666
    %v668 = vpop.f32.mrf.mxu0
    %v669 = vadd.f32 0.0, %v668
    %670 = vdwg.mxu0
    %v671 = vadd.f32 %v620, %v662
    %v672 = vadd.f32 %v621, %v664
    %v673 = vadd.f32 %v622, %v667
    %v674 = vadd.f32 %v623, %v669
    %v675 = vrot.slane %v487, 2
    %v676 = vrot.slane %v488, 2
    %v677 = vrot.slane %v489, 2
    %v678 = vrot.slane %v490, 2
    %v679 = vsel %vm222, %v677, %v678
    %v680 = vsel %vm222, %v676, %v677
    %v681 = vsel %vm222, %v675, %v676
    %v682 = vsel %vm222, %v678, %v675
    %v683 = vmul.f32 %v681, %v109
    %v684 = vmul.f32 %v680, %v110
    %v685 = vmul.f32 %v679, %v111
    %v686 = vmul.f32 %v682, %v112
    %v687 = vpack.c.bf16 %v684, %v683
    %v688 = vpack.c.bf16 %v686, %v685
    %v689 = vld [vmem:[#allocation3 + $0x48] sm:$0xf]
    %v690 = vld [vmem:[#allocation3 + $0x4c] sm:$0xf]
    %v693 = vunpack.c.l.b16 %v689
    %v694 = vunpack.c.l.b16 %v690
    %v695 = vpack.c.b16 %v694, %v693
    %v698 = vsel %vm283, %v687, 0
    %v701 = vsel %vm283, %v688, 0
    %703 = vmatpush.bf16.msra.mxu0 0
    %704 = vmatpush.bf16.msra.mxu0 0
    %705 = vmatpush.bf16.msra.mxu0 0
    %706 = vmatpush.bf16.msra.mxu0 0
    %707 = vmatpush.bf16.msra.mxu0 0
    %708 = vmatpush.bf16.msra.mxu0 0
    %709 = vmatpush.bf16.msra.mxu0 0
    %710 = vmatpush.bf16.msra.mxu0 %v695
    %711 = vmatmul.bf16.gmra.mxu0 %v698
    %v712 = vpop.f32.mrf.mxu0
    %v713 = vadd.f32 0.0, %v712
    %v714 = vpop.f32.mrf.mxu0
    %v715 = vadd.f32 0.0, %v714
    %716 = vmatmul.bf16.gmra.mxu0 %v701
    %v717 = vpop.f32.mrf.mxu0
    %v718 = vadd.f32 0.0, %v717
    %v719 = vpop.f32.mrf.mxu0
    %v720 = vadd.f32 0.0, %v719
    %721 = vdwg.mxu0
    %v722 = vadd.f32 %v671, %v713
    %v723 = vadd.f32 %v672, %v715
    %v724 = vadd.f32 %v673, %v718
    %v725 = vadd.f32 %v674, %v720
    %v726 = vld [vmem:[%s2 + $0x2] sm:$0x1]
    %v727 = vperm.slane %v726, 0
    %v728 = vadd.f32 %v722, %v727
    %v729 = vadd.f32 %v723, %v727
    %v730 = vadd.f32 %v724, %v727
    %v731 = vadd.f32 %v725, %v727
    %v732 = vmax.f32 %v728, 0.0
    %v733 = vmax.f32 %v729, 0.0
    %v734 = vmax.f32 %v730, 0.0
    %v735 = vmax.f32 %v731, 0.0
    %v736 = vrot.slane %v732, 6
    %v737 = vrot.slane %v733, 6
    %v738 = vrot.slane %v734, 6
    %v739 = vrot.slane %v735, 6
    %v740 = vsel %vm147, %v738, %v739
    %v741 = vsel %vm147, %v737, %v738
    %v742 = vsel %vm147, %v736, %v737
    %v743 = vsel %vm147, %v739, %v736
    %v744 = vmul.f32 %v743, %v57
    %v745 = vmul.f32 %v742, %v58
    %v746 = vmul.f32 %v741, %v59
    %v747 = vmul.f32 %v740, %v60
    %v748 = vpack.c.bf16 %v745, %v744
    %v749 = vpack.c.bf16 %v747, %v746
    %v750 = vld [vmem:[#allocation3 + $0x50] sm:$0xf]
    %v751 = vld [vmem:[#allocation3 + $0x54] sm:$0xf]
    %v752 = vld [vmem:[#allocation3 + $0x58] sm:$0xf]
    %v753 = vld [vmem:[#allocation3 + $0x5c] sm:$0xf]
    %v754 = vrot.slane %v732, 7
    %v755 = vrot.slane %v733, 7
    %v756 = vrot.slane %v734, 7
    %v757 = vrot.slane %v735, 7
    %v758 = vsel %vm166, %v756, %v757
    %v759 = vsel %vm166, %v755, %v756
    %v760 = vsel %vm166, %v754, %v755
    %v761 = vsel %vm166, %v757, %v754
    %v762 = vmul.f32 %v761, %v73
    %v763 = vmul.f32 %v760, %v74
    %v764 = vmul.f32 %v759, %v75
    %v765 = vmul.f32 %v758, %v76
    %v766 = vpack.c.bf16 %v763, %v762
    %v767 = vpack.c.bf16 %v765, %v764
    %v768 = vld [vmem:[#allocation3 + $0x60] sm:$0xf]
    %v769 = vld [vmem:[#allocation3 + $0x64] sm:$0xf]
    %v770 = vld [vmem:[#allocation3 + $0x68] sm:$0xf]
    %v771 = vld [vmem:[#allocation3 + $0x6c] sm:$0xf]
    %v776 = vunpack.c.l.b16 %v768
    %v777 = vunpack.c.l.b16 %v769
    %v778 = vunpack.c.l.b16 %v770
    %v779 = vunpack.c.l.b16 %v771
    %v780 = vpack.c.b16 %v777, %v776
    %v781 = vpack.c.b16 %v779, %v778
    %vm784 = vcmask 261120
    %v786 = vsel %vm784, %v766, 0
    %v789 = vsel %vm784, %v767, 0
    %791 = vmatpush.bf16.msra.mxu0 0
    %792 = vmatpush.bf16.msra.mxu0 0
    %793 = vmatpush.bf16.msra.mxu0 0
    %794 = vmatpush.bf16.msra.mxu0 0
    %795 = vmatpush.bf16.msra.mxu0 0
    %796 = vmatpush.bf16.msra.mxu0 0
    %797 = vmatpush.bf16.msra.mxu0 %v781
    %798 = vmatpush.bf16.msra.mxu0 %v780
    %799 = vmatmul.bf16.gmra.mxu0 %v786
    %v800 = vpop.f32.mrf.mxu0
    %v801 = vadd.f32 0.0, %v800
    %v802 = vpop.f32.mrf.mxu0
    %v803 = vadd.f32 0.0, %v802
    %804 = vmatmul.bf16.gmra.mxu0 %v789
    %v805 = vpop.f32.mrf.mxu0
    %v806 = vadd.f32 0.0, %v805
    %v807 = vpop.f32.mrf.mxu0
    %v808 = vadd.f32 0.0, %v807
    %809 = vdwg.mxu0
    %v814 = vunpack.c.l.b16 %v750
    %v815 = vunpack.c.l.b16 %v751
    %v816 = vunpack.c.l.b16 %v752
    %v817 = vunpack.c.l.b16 %v753
    %v818 = vpack.c.b16 %v815, %v814
    %v819 = vpack.c.b16 %v817, %v816
    %v823 = vsel %vm784, %v748, 0
    %v826 = vsel %vm784, %v749, 0
    %828 = vmatpush.bf16.msra.mxu0 0
    %829 = vmatpush.bf16.msra.mxu0 0
    %830 = vmatpush.bf16.msra.mxu0 0
    %831 = vmatpush.bf16.msra.mxu0 0
    %832 = vmatpush.bf16.msra.mxu0 0
    %833 = vmatpush.bf16.msra.mxu0 0
    %834 = vmatpush.bf16.msra.mxu0 %v819
    %835 = vmatpush.bf16.msra.mxu0 %v818
    %836 = vmatmul.bf16.gmra.mxu0 %v823
    %v837 = vpop.f32.mrf.mxu0
    %v838 = vadd.f32 %v801, %v837
    %v839 = vpop.f32.mrf.mxu0
    %v840 = vadd.f32 %v803, %v839
    %841 = vmatmul.bf16.gmra.mxu0 %v826
    %v842 = vpop.f32.mrf.mxu0
    %v843 = vadd.f32 %v806, %v842
    %v844 = vpop.f32.mrf.mxu0
    %v845 = vadd.f32 %v808, %v844
    %846 = vdwg.mxu0
    %v847 = vpack.c.bf16 %v733, %v732
    %v848 = vpack.c.bf16 %v735, %v734
    %v849 = vld [vmem:[#allocation3 + $0x70] sm:$0xf]
    %v850 = vld [vmem:[#allocation3 + $0x74] sm:$0xf]
    %v851 = vld [vmem:[#allocation3 + $0x78] sm:$0xf]
    %v852 = vld [vmem:[#allocation3 + $0x7c] sm:$0xf]
    %v857 = vunpack.c.l.b16 %v849
    %v858 = vunpack.c.l.b16 %v850
    %v859 = vunpack.c.l.b16 %v851
    %v860 = vunpack.c.l.b16 %v852
    %v861 = vpack.c.b16 %v858, %v857
    %v862 = vpack.c.b16 %v860, %v859
    %v866 = vsel %vm784, %v847, 0
    %v869 = vsel %vm784, %v848, 0
    %871 = vmatpush.bf16.msra.mxu0 0
    %872 = vmatpush.bf16.msra.mxu0 0
    %873 = vmatpush.bf16.msra.mxu0 0
    %874 = vmatpush.bf16.msra.mxu0 0
    %875 = vmatpush.bf16.msra.mxu0 0
    %876 = vmatpush.bf16.msra.mxu0 0
    %877 = vmatpush.bf16.msra.mxu0 %v862
    %878 = vmatpush.bf16.msra.mxu0 %v861
    %879 = vmatmul.bf16.gmra.mxu0 %v866
    %v880 = vpop.f32.mrf.mxu0
    %v881 = vadd.f32 0.0, %v880
    %v882 = vpop.f32.mrf.mxu0
    %v883 = vadd.f32 0.0, %v882
    %884 = vmatmul.bf16.gmra.mxu0 %v869
    %v885 = vpop.f32.mrf.mxu0
    %v886 = vadd.f32 0.0, %v885
    %v887 = vpop.f32.mrf.mxu0
    %v888 = vadd.f32 0.0, %v887
    %889 = vdwg.mxu0
    %v890 = vadd.f32 %v838, %v881
    %v891 = vadd.f32 %v840, %v883
    %v892 = vadd.f32 %v843, %v886
    %v893 = vadd.f32 %v845, %v888
    %v894 = vrot.slane %v732, 1
    %v895 = vrot.slane %v733, 1
    %v896 = vrot.slane %v734, 1
    %v897 = vrot.slane %v735, 1
    %v898 = vsel %vm199, %v896, %v897
    %v899 = vsel %vm199, %v895, %v896
    %v900 = vsel %vm199, %v894, %v895
    %v901 = vsel %vm199, %v897, %v894
    %v902 = vmul.f32 %v900, %v93
    %v903 = vmul.f32 %v899, %v94
    %v904 = vmul.f32 %v898, %v95
    %v905 = vmul.f32 %v901, %v96
    %v906 = vpack.c.bf16 %v903, %v902
    %v907 = vpack.c.bf16 %v905, %v904
    %v908 = vld [vmem:[#allocation3 + $0x80] sm:$0xf]
    %v909 = vld [vmem:[#allocation3 + $0x84] sm:$0xf]
    %v910 = vld [vmem:[#allocation3 + $0x88] sm:$0xf]
    %v911 = vld [vmem:[#allocation3 + $0x8c] sm:$0xf]
    %v916 = vunpack.c.l.b16 %v908
    %v917 = vunpack.c.l.b16 %v909
    %v918 = vunpack.c.l.b16 %v910
    %v919 = vunpack.c.l.b16 %v911
    %v920 = vpack.c.b16 %v917, %v916
    %v921 = vpack.c.b16 %v919, %v918
    %v925 = vsel %vm784, %v906, 0
    %v928 = vsel %vm784, %v907, 0
    %930 = vmatpush.bf16.msra.mxu0 0
    %931 = vmatpush.bf16.msra.mxu0 0
    %932 = vmatpush.bf16.msra.mxu0 0
    %933 = vmatpush.bf16.msra.mxu0 0
    %934 = vmatpush.bf16.msra.mxu0 0
    %935 = vmatpush.bf16.msra.mxu0 0
    %936 = vmatpush.bf16.msra.mxu0 %v921
    %937 = vmatpush.bf16.msra.mxu0 %v920
    %938 = vmatmul.bf16.gmra.mxu0 %v925
    %v939 = vpop.f32.mrf.mxu0
    %v940 = vadd.f32 0.0, %v939
    %v941 = vpop.f32.mrf.mxu0
    %v942 = vadd.f32 0.0, %v941
    %943 = vmatmul.bf16.gmra.mxu0 %v928
    %v944 = vpop.f32.mrf.mxu0
    %v945 = vadd.f32 0.0, %v944
    %v946 = vpop.f32.mrf.mxu0
    %v947 = vadd.f32 0.0, %v946
    %948 = vdwg.mxu0
    %v949 = vadd.f32 %v890, %v940
    %v950 = vadd.f32 %v891, %v942
    %v951 = vadd.f32 %v892, %v945
    %v952 = vadd.f32 %v893, %v947
    %v953 = vrot.slane %v732, 2
    %v954 = vrot.slane %v733, 2
    %v955 = vrot.slane %v734, 2
    %v956 = vrot.slane %v735, 2
    %v957 = vsel %vm222, %v955, %v956
    %v958 = vsel %vm222, %v954, %v955
    %v959 = vsel %vm222, %v953, %v954
    %v960 = vsel %vm222, %v956, %v953
    %v961 = vmul.f32 %v959, %v109
    %v962 = vmul.f32 %v958, %v110
    %v963 = vmul.f32 %v957, %v111
    %v964 = vmul.f32 %v960, %v112
    %v965 = vpack.c.bf16 %v962, %v961
    %v966 = vpack.c.bf16 %v964, %v963
    %v967 = vld [vmem:[#allocation3 + $0x90] sm:$0xf]
    %v968 = vld [vmem:[#allocation3 + $0x94] sm:$0xf]
    %v969 = vld [vmem:[#allocation3 + $0x98] sm:$0xf]
    %v970 = vld [vmem:[#allocation3 + $0x9c] sm:$0xf]
    %v975 = vunpack.c.l.b16 %v967
    %v976 = vunpack.c.l.b16 %v968
    %v977 = vunpack.c.l.b16 %v969
    %v978 = vunpack.c.l.b16 %v970
    %v979 = vpack.c.b16 %v976, %v975
    %v980 = vpack.c.b16 %v978, %v977
    %v984 = vsel %vm784, %v965, 0
    %v987 = vsel %vm784, %v966, 0
    %989 = vmatpush.bf16.msra.mxu0 0
    %990 = vmatpush.bf16.msra.mxu0 0
    %991 = vmatpush.bf16.msra.mxu0 0
    %992 = vmatpush.bf16.msra.mxu0 0
    %993 = vmatpush.bf16.msra.mxu0 0
    %994 = vmatpush.bf16.msra.mxu0 0
    %995 = vmatpush.bf16.msra.mxu0 %v980
    %996 = vmatpush.bf16.msra.mxu0 %v979
    %997 = vmatmul.bf16.gmra.mxu0 %v984
    %v998 = vpop.f32.mrf.mxu0
    %v999 = vadd.f32 0.0, %v998
    %v1000 = vpop.f32.mrf.mxu0
    %v1001 = vadd.f32 0.0, %v1000
    %1002 = vmatmul.bf16.gmra.mxu0 %v987
    %v1003 = vpop.f32.mrf.mxu0
    %v1004 = vadd.f32 0.0, %v1003
    %v1005 = vpop.f32.mrf.mxu0
    %v1006 = vadd.f32 0.0, %v1005
    %1007 = vdwg.mxu0
    %v1008 = vadd.f32 %v949, %v999
    %v1009 = vadd.f32 %v950, %v1001
    %v1010 = vadd.f32 %v951, %v1004
    %v1011 = vadd.f32 %v952, %v1006
    %v1012 = vld [vmem:[%s2 + $0x3] sm:$0x1]
    %v1013 = vperm.slane %v1012, 0
    %v1014 = vadd.f32 %v1008, %v1013
    %v1015 = vadd.f32 %v1009, %v1013
    %v1016 = vadd.f32 %v1010, %v1013
    %v1017 = vadd.f32 %v1011, %v1013
    %v1018 = vmax.f32 %v1014, 0.0
    %v1019 = vmax.f32 %v1015, 0.0
    %v1020 = vmax.f32 %v1016, 0.0
    %v1021 = vmax.f32 %v1017, 0.0
    %v1022 = vrot.slane %v1018, 6
    %v1023 = vrot.slane %v1019, 6
    %v1024 = vrot.slane %v1020, 6
    %v1025 = vrot.slane %v1021, 6
    %v1026 = vsel %vm147, %v1024, %v1025
    %v1027 = vsel %vm147, %v1023, %v1024
    %v1028 = vsel %vm147, %v1022, %v1023
    %v1029 = vsel %vm147, %v1025, %v1022
    %v1030 = vmul.f32 %v1029, %v57
    %v1031 = vmul.f32 %v1028, %v58
    %v1032 = vmul.f32 %v1027, %v59
    %v1033 = vmul.f32 %v1026, %v60
    %v1034 = vpack.c.bf16 %v1031, %v1030
    %v1035 = vpack.c.bf16 %v1033, %v1032
    %v1036 = vld [vmem:[#allocation3 + $0xa0] sm:$0xf]
    %v1037 = vld [vmem:[#allocation3 + $0xa4] sm:$0xf]
    %v1038 = vld [vmem:[#allocation3 + $0xa8] sm:$0xf]
    %v1039 = vld [vmem:[#allocation3 + $0xac] sm:$0xf]
    %v1040 = vrot.slane %v1018, 7
    %v1041 = vrot.slane %v1019, 7
    %v1042 = vrot.slane %v1020, 7
    %v1043 = vrot.slane %v1021, 7
    %v1044 = vsel %vm166, %v1042, %v1043
    %v1045 = vsel %vm166, %v1041, %v1042
    %v1046 = vsel %vm166, %v1040, %v1041
    %v1047 = vsel %vm166, %v1043, %v1040
    %v1048 = vmul.f32 %v1047, %v73
    %v1049 = vmul.f32 %v1046, %v74
    %v1050 = vmul.f32 %v1045, %v75
    %v1051 = vmul.f32 %v1044, %v76
    %v1052 = vpack.c.bf16 %v1049, %v1048
    %v1053 = vpack.c.bf16 %v1051, %v1050
    %v1054 = vld [vmem:[#allocation3 + $0xb0] sm:$0xf]
    %v1055 = vld [vmem:[#allocation3 + $0xb4] sm:$0xf]
    %v1056 = vld [vmem:[#allocation3 + $0xb8] sm:$0xf]
    %v1057 = vld [vmem:[#allocation3 + $0xbc] sm:$0xf]
    %v1062 = vunpack.c.l.b16 %v1054
    %v1063 = vunpack.c.l.b16 %v1055
    %v1064 = vunpack.c.l.b16 %v1056
    %v1065 = vunpack.c.l.b16 %v1057
    %v1066 = vpack.c.b16 %v1063, %v1062
    %v1067 = vpack.c.b16 %v1065, %v1064
    %v1071 = vsel %vm784, %v1052, 0
    %v1074 = vsel %vm784, %v1053, 0
    %1076 = vmatpush.bf16.msra.mxu0 0
    %1077 = vmatpush.bf16.msra.mxu0 0
    %1078 = vmatpush.bf16.msra.mxu0 0
    %1079 = vmatpush.bf16.msra.mxu0 0
    %1080 = vmatpush.bf16.msra.mxu0 0
    %1081 = vmatpush.bf16.msra.mxu0 0
    %1082 = vmatpush.bf16.msra.mxu0 %v1067
    %1083 = vmatpush.bf16.msra.mxu0 %v1066
    %1084 = vmatmul.bf16.gmra.mxu0 %v1071
    %v1085 = vpop.f32.mrf.mxu0
    %v1086 = vadd.f32 0.0, %v1085
    %v1087 = vpop.f32.mrf.mxu0
    %v1088 = vadd.f32 0.0, %v1087
    %1089 = vmatmul.bf16.gmra.mxu0 %v1074
    %v1090 = vpop.f32.mrf.mxu0
    %v1091 = vadd.f32 0.0, %v1090
    %v1092 = vpop.f32.mrf.mxu0
    %v1093 = vadd.f32 0.0, %v1092
    %1094 = vdwg.mxu0
    %v1099 = vunpack.c.l.b16 %v1036
    %v1100 = vunpack.c.l.b16 %v1037
    %v1101 = vunpack.c.l.b16 %v1038
    %v1102 = vunpack.c.l.b16 %v1039
    %v1103 = vpack.c.b16 %v1100, %v1099
    %v1104 = vpack.c.b16 %v1102, %v1101
    %v1108 = vsel %vm784, %v1034, 0
    %v1111 = vsel %vm784, %v1035, 0
    %1113 = vmatpush.bf16.msra.mxu0 0
    %1114 = vmatpush.bf16.msra.mxu0 0
    %1115 = vmatpush.bf16.msra.mxu0 0
    %1116 = vmatpush.bf16.msra.mxu0 0
    %1117 = vmatpush.bf16.msra.mxu0 0
    %1118 = vmatpush.bf16.msra.mxu0 0
    %1119 = vmatpush.bf16.msra.mxu0 %v1104
    %1120 = vmatpush.bf16.msra.mxu0 %v1103
    %1121 = vmatmul.bf16.gmra.mxu0 %v1108
    %v1122 = vpop.f32.mrf.mxu0
    %v1123 = vadd.f32 %v1086, %v1122
    %v1124 = vpop.f32.mrf.mxu0
    %v1125 = vadd.f32 %v1088, %v1124
    %1126 = vmatmul.bf16.gmra.mxu0 %v1111
    %v1127 = vpop.f32.mrf.mxu0
    %v1128 = vadd.f32 %v1091, %v1127
    %v1129 = vpop.f32.mrf.mxu0
    %v1130 = vadd.f32 %v1093, %v1129
    %1131 = vdwg.mxu0
    %v1132 = vpack.c.bf16 %v1019, %v1018
    %v1133 = vpack.c.bf16 %v1021, %v1020
    %v1134 = vld [vmem:[#allocation3 + $0xc0] sm:$0xf]
    %v1135 = vld [vmem:[#allocation3 + $0xc4] sm:$0xf]
    %v1136 = vld [vmem:[#allocation3 + $0xc8] sm:$0xf]
    %v1137 = vld [vmem:[#allocation3 + $0xcc] sm:$0xf]
    %v1142 = vunpack.c.l.b16 %v1134
    %v1143 = vunpack.c.l.b16 %v1135
    %v1144 = vunpack.c.l.b16 %v1136
    %v1145 = vunpack.c.l.b16 %v1137
    %v1146 = vpack.c.b16 %v1143, %v1142
    %v1147 = vpack.c.b16 %v1145, %v1144
    %v1151 = vsel %vm784, %v1132, 0
    %v1154 = vsel %vm784, %v1133, 0
    %1156 = vmatpush.bf16.msra.mxu0 0
    %1157 = vmatpush.bf16.msra.mxu0 0
    %1158 = vmatpush.bf16.msra.mxu0 0
    %1159 = vmatpush.bf16.msra.mxu0 0
    %1160 = vmatpush.bf16.msra.mxu0 0
    %1161 = vmatpush.bf16.msra.mxu0 0
    %1162 = vmatpush.bf16.msra.mxu0 %v1147
    %1163 = vmatpush.bf16.msra.mxu0 %v1146
    %1164 = vmatmul.bf16.gmra.mxu0 %v1151
    %v1165 = vpop.f32.mrf.mxu0
    %v1166 = vadd.f32 0.0, %v1165
    %v1167 = vpop.f32.mrf.mxu0
    %v1168 = vadd.f32 0.0, %v1167
    %1169 = vmatmul.bf16.gmra.mxu0 %v1154
    %v1170 = vpop.f32.mrf.mxu0
    %v1171 = vadd.f32 0.0, %v1170
    %v1172 = vpop.f32.mrf.mxu0
    %v1173 = vadd.f32 0.0, %v1172
    %1174 = vdwg.mxu0
    %v1175 = vadd.f32 %v1123, %v1166
    %v1176 = vadd.f32 %v1125, %v1168
    %v1177 = vadd.f32 %v1128, %v1171
    %v1178 = vadd.f32 %v1130, %v1173
    %v1179 = vrot.slane %v1018, 1
    %v1180 = vrot.slane %v1019, 1
    %v1181 = vrot.slane %v1020, 1
    %v1182 = vrot.slane %v1021, 1
    %v1183 = vsel %vm199, %v1181, %v1182
    %v1184 = vsel %vm199, %v1180, %v1181
    %v1185 = vsel %vm199, %v1179, %v1180
    %v1186 = vsel %vm199, %v1182, %v1179
    %v1187 = vmul.f32 %v1185, %v93
    %v1188 = vmul.f32 %v1184, %v94
    %v1189 = vmul.f32 %v1183, %v95
    %v1190 = vmul.f32 %v1186, %v96
    %v1191 = vpack.c.bf16 %v1188, %v1187
    %v1192 = vpack.c.bf16 %v1190, %v1189
    %v1193 = vld [vmem:[#allocation3 + $0xd0] sm:$0xf]
    %v1194 = vld [vmem:[#allocation3 + $0xd4] sm:$0xf]
    %v1195 = vld [vmem:[#allocation3 + $0xd8] sm:$0xf]
    %v1196 = vld [vmem:[#allocation3 + $0xdc] sm:$0xf]
    %v1201 = vunpack.c.l.b16 %v1193
    %v1202 = vunpack.c.l.b16 %v1194
    %v1203 = vunpack.c.l.b16 %v1195
    %v1204 = vunpack.c.l.b16 %v1196
    %v1205 = vpack.c.b16 %v1202, %v1201
    %v1206 = vpack.c.b16 %v1204, %v1203
    %v1210 = vsel %vm784, %v1191, 0
    %v1213 = vsel %vm784, %v1192, 0
    %1215 = vmatpush.bf16.msra.mxu0 0
    %1216 = vmatpush.bf16.msra.mxu0 0
    %1217 = vmatpush.bf16.msra.mxu0 0
    %1218 = vmatpush.bf16.msra.mxu0 0
    %1219 = vmatpush.bf16.msra.mxu0 0
    %1220 = vmatpush.bf16.msra.mxu0 0
    %1221 = vmatpush.bf16.msra.mxu0 %v1206
    %1222 = vmatpush.bf16.msra.mxu0 %v1205
    %1223 = vmatmul.bf16.gmra.mxu0 %v1210
    %v1224 = vpop.f32.mrf.mxu0
    %v1225 = vadd.f32 0.0, %v1224
    %v1226 = vpop.f32.mrf.mxu0
    %v1227 = vadd.f32 0.0, %v1226
    %1228 = vmatmul.bf16.gmra.mxu0 %v1213
    %v1229 = vpop.f32.mrf.mxu0
    %v1230 = vadd.f32 0.0, %v1229
    %v1231 = vpop.f32.mrf.mxu0
    %v1232 = vadd.f32 0.0, %v1231
    %1233 = vdwg.mxu0
    %v1234 = vadd.f32 %v1175, %v1225
    %v1235 = vadd.f32 %v1176, %v1227
    %v1236 = vadd.f32 %v1177, %v1230
    %v1237 = vadd.f32 %v1178, %v1232
    %v1238 = vrot.slane %v1018, 2
    %v1239 = vrot.slane %v1019, 2
    %v1240 = vrot.slane %v1020, 2
    %v1241 = vrot.slane %v1021, 2
    %v1242 = vsel %vm222, %v1240, %v1241
    %v1243 = vsel %vm222, %v1239, %v1240
    %v1244 = vsel %vm222, %v1238, %v1239
    %v1245 = vsel %vm222, %v1241, %v1238
    %v1246 = vmul.f32 %v1244, %v109
    %v1247 = vmul.f32 %v1243, %v110
    %v1248 = vmul.f32 %v1242, %v111
    %v1249 = vmul.f32 %v1245, %v112
    %v1250 = vpack.c.bf16 %v1247, %v1246
    %v1251 = vpack.c.bf16 %v1249, %v1248
    %v1252 = vld [vmem:[#allocation3 + $0xe0] sm:$0xf]
    %v1253 = vld [vmem:[#allocation3 + $0xe4] sm:$0xf]
    %v1254 = vld [vmem:[#allocation3 + $0xe8] sm:$0xf]
    %v1255 = vld [vmem:[#allocation3 + $0xec] sm:$0xf]
    %v1260 = vunpack.c.l.b16 %v1252
    %v1261 = vunpack.c.l.b16 %v1253
    %v1262 = vunpack.c.l.b16 %v1254
    %v1263 = vunpack.c.l.b16 %v1255
    %v1264 = vpack.c.b16 %v1261, %v1260
    %v1265 = vpack.c.b16 %v1263, %v1262
    %v1269 = vsel %vm784, %v1250, 0
    %v1272 = vsel %vm784, %v1251, 0
    %1274 = vmatpush.bf16.msra.mxu0 0
    %1275 = vmatpush.bf16.msra.mxu0 0
    %1276 = vmatpush.bf16.msra.mxu0 0
    %1277 = vmatpush.bf16.msra.mxu0 0
    %1278 = vmatpush.bf16.msra.mxu0 0
    %1279 = vmatpush.bf16.msra.mxu0 0
    %1280 = vmatpush.bf16.msra.mxu0 %v1265
    %1281 = vmatpush.bf16.msra.mxu0 %v1264
    %1282 = vmatmul.bf16.gmra.mxu0 %v1269
    %v1283 = vpop.f32.mrf.mxu0
    %v1284 = vadd.f32 0.0, %v1283
    %v1285 = vpop.f32.mrf.mxu0
    %v1286 = vadd.f32 0.0, %v1285
    %1287 = vmatmul.bf16.gmra.mxu0 %v1272
    %v1288 = vpop.f32.mrf.mxu0
    %v1289 = vadd.f32 0.0, %v1288
    %v1290 = vpop.f32.mrf.mxu0
    %v1291 = vadd.f32 0.0, %v1290
    %1292 = vdwg.mxu0
    %v1293 = vadd.f32 %v1234, %v1284
    %v1294 = vadd.f32 %v1235, %v1286
    %v1295 = vadd.f32 %v1236, %v1289
    %v1296 = vadd.f32 %v1237, %v1291
    %v1297 = vld [vmem:[%s2 + $0x4] sm:$0x1]
    %v1298 = vperm.slane %v1297, 0
    %v1299 = vadd.f32 %v1293, %v1298
    %v1300 = vadd.f32 %v1294, %v1298
    %v1301 = vadd.f32 %v1295, %v1298
    %v1302 = vadd.f32 %v1296, %v1298
    %v1303 = vmax.f32 %v1299, 0.0
    %v1304 = vmax.f32 %v1300, 0.0
    %v1305 = vmax.f32 %v1301, 0.0
    %v1306 = vmax.f32 %v1302, 0.0
    %1307 = vst.msk [vmem:[#allocation2] sm:$0xff] %vm784, %v1303
    %1308 = vst.msk [vmem:[#allocation2 + $0x8] sm:$0xff] %vm784, %v1304
    %1309 = vst.msk [vmem:[#allocation2 + $0x10] sm:$0xff] %vm784, %v1305
    %1310 = vst.msk [vmem:[#allocation2 + $0x18] sm:$0xff] %vm784, %v1306
    %v1311 = vld [vmem:[#allocation2] ss:$16 sm:$0x3]
    %v1312 = vpack.c.bf16 %v1311, %v1311
    %v1313 = vld [vmem:[#allocation3 + $0xf0] sm:$0xf]
    %v1314 = vld [vmem:[#allocation3 + $0xf4] sm:$0xf]
    %v1315 = vld [vmem:[#allocation3 + $0xf8] sm:$0xf]
    %v1316 = vld [vmem:[#allocation3 + $0xfc] sm:$0xf]
    %s1317 = scalar_lea.vmem [#allocation2], 1
    %v1318 = vld [vmem:[%s1317] ss:$16 sm:$0x3]
    %v1319 = vpack.c.bf16 %v1318, %v1318
    %v1320 = vld [vmem:[#allocation3 + $0x100] sm:$0xf]
    %v1321 = vld [vmem:[#allocation3 + $0x104] sm:$0xf]
    %v1322 = vld [vmem:[#allocation3 + $0x108] sm:$0xf]
    %v1323 = vld [vmem:[#allocation3 + $0x10c] sm:$0xf]
    %v1328 = vunpack.c.l.b16 %v1320
    %v1329 = vunpack.c.l.b16 %v1321
    %v1330 = vunpack.c.l.b16 %v1322
    %v1331 = vunpack.c.l.b16 %v1323
    %v1332 = vpack.c.b16 %v1329, %v1328
    %v1333 = vpack.c.b16 %v1331, %v1330
    %v1337 = vsel %vm784, %v1319, 0
    %1339 = vmatpush.bf16.msra.mxu0 0
    %1340 = vmatpush.bf16.msra.mxu0 0
    %1341 = vmatpush.bf16.msra.mxu0 0
    %1342 = vmatpush.bf16.msra.mxu0 0
    %1343 = vmatpush.bf16.msra.mxu0 0
    %1344 = vmatpush.bf16.msra.mxu0 0
    %1345 = vmatpush.bf16.msra.mxu0 %v1333
    %1346 = vmatpush.bf16.msra.mxu0 %v1332
    %1347 = vmatmul.bf16.gmra.mxu0 %v1337
    %v1348 = vpop.f32.mrf.mxu0
    %v1349 = vadd.f32 0.0, %v1348
    %v1350 = vpop.f32.mrf.mxu0
    %1351 = vdwg.mxu0
    %v1356 = vunpack.c.l.b16 %v1313
    %v1357 = vunpack.c.l.b16 %v1314
    %v1358 = vunpack.c.l.b16 %v1315
    %v1359 = vunpack.c.l.b16 %v1316
    %v1360 = vpack.c.b16 %v1357, %v1356
    %v1361 = vpack.c.b16 %v1359, %v1358
    %v1365 = vsel %vm784, %v1312, 0
    %1367 = vmatpush.bf16.msra.mxu0 0
    %1368 = vmatpush.bf16.msra.mxu0 0
    %1369 = vmatpush.bf16.msra.mxu0 0
    %1370 = vmatpush.bf16.msra.mxu0 0
    %1371 = vmatpush.bf16.msra.mxu0 0
    %1372 = vmatpush.bf16.msra.mxu0 0
    %1373 = vmatpush.bf16.msra.mxu0 %v1361
    %1374 = vmatpush.bf16.msra.mxu0 %v1360
    %1375 = vmatmul.bf16.gmra.mxu0 %v1365
    %v1376 = vpop.f32.mrf.mxu0
    %v1377 = vadd.f32 %v1349, %v1376
    %v1378 = vpop.f32.mrf.mxu0
    %1379 = vdwg.mxu0
    %s1380 = scalar_lea.vmem [#allocation2], 2
    %v1381 = vld [vmem:[%s1380] ss:$16 sm:$0x3]
    %v1382 = vpack.c.bf16 %v1381, %v1381
    %v1383 = vld [vmem:[#allocation3 + $0x110] sm:$0xf]
    %v1384 = vld [vmem:[#allocation3 + $0x114] sm:$0xf]
    %v1385 = vld [vmem:[#allocation3 + $0x118] sm:$0xf]
    %v1386 = vld [vmem:[#allocation3 + $0x11c] sm:$0xf]
    %v1391 = vunpack.c.l.b16 %v1383
    %v1392 = vunpack.c.l.b16 %v1384
    %v1393 = vunpack.c.l.b16 %v1385
    %v1394 = vunpack.c.l.b16 %v1386
    %v1395 = vpack.c.b16 %v1392, %v1391
    %v1396 = vpack.c.b16 %v1394, %v1393
    %v1400 = vsel %vm784, %v1382, 0
    %1402 = vmatpush.bf16.msra.mxu0 0
    %1403 = vmatpush.bf16.msra.mxu0 0
    %1404 = vmatpush.bf16.msra.mxu0 0
    %1405 = vmatpush.bf16.msra.mxu0 0
    %1406 = vmatpush.bf16.msra.mxu0 0
    %1407 = vmatpush.bf16.msra.mxu0 0
    %1408 = vmatpush.bf16.msra.mxu0 %v1396
    %1409 = vmatpush.bf16.msra.mxu0 %v1395
    %1410 = vmatmul.bf16.gmra.mxu0 %v1400
    %v1411 = vpop.f32.mrf.mxu0
    %v1412 = vadd.f32 0.0, %v1411
    %v1413 = vpop.f32.mrf.mxu0
    %1414 = vdwg.mxu0
    %v1415 = vadd.f32 %v1377, %v1412
    %s1416 = scalar_lea.vmem [#allocation2], 3
    %v1417 = vld [vmem:[%s1416] ss:$16 sm:$0x3]
    %v1418 = vpack.c.bf16 %v1417, %v1417
    %v1419 = vld [vmem:[#allocation3 + $0x120] sm:$0xf]
    %v1420 = vld [vmem:[#allocation3 + $0x124] sm:$0xf]
    %v1421 = vld [vmem:[#allocation3 + $0x128] sm:$0xf]
    %v1422 = vld [vmem:[#allocation3 + $0x12c] sm:$0xf]
    %v1427 = vunpack.c.l.b16 %v1419
    %v1428 = vunpack.c.l.b16 %v1420
    %v1429 = vunpack.c.l.b16 %v1421
    %v1430 = vunpack.c.l.b16 %v1422
    %v1431 = vpack.c.b16 %v1428, %v1427
    %v1432 = vpack.c.b16 %v1430, %v1429
    %v1436 = vsel %vm784, %v1418, 0
    %1438 = vmatpush.bf16.msra.mxu0 0
    %1439 = vmatpush.bf16.msra.mxu0 0
    %1440 = vmatpush.bf16.msra.mxu0 0
    %1441 = vmatpush.bf16.msra.mxu0 0
    %1442 = vmatpush.bf16.msra.mxu0 0
    %1443 = vmatpush.bf16.msra.mxu0 0
    %1444 = vmatpush.bf16.msra.mxu0 %v1432
    %1445 = vmatpush.bf16.msra.mxu0 %v1431
    %1446 = vmatmul.bf16.gmra.mxu0 %v1436
    %v1447 = vpop.f32.mrf.mxu0
    %v1448 = vadd.f32 0.0, %v1447
    %v1449 = vpop.f32.mrf.mxu0
    %1450 = vdwg.mxu0
    %v1451 = vadd.f32 %v1415, %v1448
    %s1452 = scalar_lea.vmem [#allocation2], 4
    %v1453 = vld [vmem:[%s1452] ss:$16 sm:$0x3]
    %v1454 = vpack.c.bf16 %v1453, %v1453
    %v1455 = vld [vmem:[#allocation3 + $0x130] sm:$0xf]
    %v1456 = vld [vmem:[#allocation3 + $0x134] sm:$0xf]
    %v1457 = vld [vmem:[#allocation3 + $0x138] sm:$0xf]
    %v1458 = vld [vmem:[#allocation3 + $0x13c] sm:$0xf]
    %v1463 = vunpack.c.l.b16 %v1455
    %v1464 = vunpack.c.l.b16 %v1456
    %v1465 = vunpack.c.l.b16 %v1457
    %v1466 = vunpack.c.l.b16 %v1458
    %v1467 = vpack.c.b16 %v1464, %v1463
    %v1468 = vpack.c.b16 %v1466, %v1465
    %v1472 = vsel %vm784, %v1454, 0
    %1474 = vmatpush.bf16.msra.mxu0 0
    %1475 = vmatpush.bf16.msra.mxu0 0
    %1476 = vmatpush.bf16.msra.mxu0 0
    %1477 = vmatpush.bf16.msra.mxu0 0
    %1478 = vmatpush.bf16.msra.mxu0 0
    %1479 = vmatpush.bf16.msra.mxu0 0
    %1480 = vmatpush.bf16.msra.mxu0 %v1468
    %1481 = vmatpush.bf16.msra.mxu0 %v1467
    %1482 = vmatmul.bf16.gmra.mxu0 %v1472
    %v1483 = vpop.f32.mrf.mxu0
    %v1484 = vadd.f32 0.0, %v1483
    %v1485 = vpop.f32.mrf.mxu0
    %1486 = vdwg.mxu0
    %v1487 = vadd.f32 %v1451, %v1484
    %s1488 = scalar_lea.vmem [#allocation2], 5
    %v1489 = vld [vmem:[%s1488] ss:$16 sm:$0x3]
    %v1490 = vpack.c.bf16 %v1489, %v1489
    %v1491 = vld [vmem:[#allocation3 + $0x140] sm:$0xf]
    %v1492 = vld [vmem:[#allocation3 + $0x144] sm:$0xf]
    %v1493 = vld [vmem:[#allocation3 + $0x148] sm:$0xf]
    %v1494 = vld [vmem:[#allocation3 + $0x14c] sm:$0xf]
    %v1499 = vunpack.c.l.b16 %v1491
    %v1500 = vunpack.c.l.b16 %v1492
    %v1501 = vunpack.c.l.b16 %v1493
    %v1502 = vunpack.c.l.b16 %v1494
    %v1503 = vpack.c.b16 %v1500, %v1499
    %v1504 = vpack.c.b16 %v1502, %v1501
    %v1508 = vsel %vm784, %v1490, 0
    %1510 = vmatpush.bf16.msra.mxu0 0
    %1511 = vmatpush.bf16.msra.mxu0 0
    %1512 = vmatpush.bf16.msra.mxu0 0
    %1513 = vmatpush.bf16.msra.mxu0 0
    %1514 = vmatpush.bf16.msra.mxu0 0
    %1515 = vmatpush.bf16.msra.mxu0 0
    %1516 = vmatpush.bf16.msra.mxu0 %v1504
    %1517 = vmatpush.bf16.msra.mxu0 %v1503
    %1518 = vmatmul.bf16.gmra.mxu0 %v1508
    %v1519 = vpop.f32.mrf.mxu0
    %v1520 = vadd.f32 0.0, %v1519
    %v1521 = vpop.f32.mrf.mxu0
    %1522 = vdwg.mxu0
    %v1523 = vadd.f32 %v1487, %v1520
    %s1524 = scalar_lea.vmem [#allocation2], 6
    %v1525 = vld [vmem:[%s1524] ss:$16 sm:$0x3]
    %v1526 = vpack.c.bf16 %v1525, %v1525
    %v1527 = vld [vmem:[#allocation3 + $0x150] sm:$0xf]
    %v1528 = vld [vmem:[#allocation3 + $0x154] sm:$0xf]
    %v1529 = vld [vmem:[#allocation3 + $0x158] sm:$0xf]
    %v1530 = vld [vmem:[#allocation3 + $0x15c] sm:$0xf]
    %v1535 = vunpack.c.l.b16 %v1527
    %v1536 = vunpack.c.l.b16 %v1528
    %v1537 = vunpack.c.l.b16 %v1529
    %v1538 = vunpack.c.l.b16 %v1530
    %v1539 = vpack.c.b16 %v1536, %v1535
    %v1540 = vpack.c.b16 %v1538, %v1537
    %v1544 = vsel %vm784, %v1526, 0
    %1546 = vmatpush.bf16.msra.mxu0 0
    %1547 = vmatpush.bf16.msra.mxu0 0
    %1548 = vmatpush.bf16.msra.mxu0 0
    %1549 = vmatpush.bf16.msra.mxu0 0
    %1550 = vmatpush.bf16.msra.mxu0 0
    %1551 = vmatpush.bf16.msra.mxu0 0
    %1552 = vmatpush.bf16.msra.mxu0 %v1540
    %1553 = vmatpush.bf16.msra.mxu0 %v1539
    %1554 = vmatmul.bf16.gmra.mxu0 %v1544
    %v1555 = vpop.f32.mrf.mxu0
    %v1556 = vadd.f32 0.0, %v1555
    %v1557 = vpop.f32.mrf.mxu0
    %1558 = vdwg.mxu0
    %v1559 = vadd.f32 %v1523, %v1556
    %s1560 = scalar_lea.vmem [#allocation2], 7
    %v1561 = vld [vmem:[%s1560] ss:$16 sm:$0x3]
    %v1562 = vpack.c.bf16 %v1561, %v1561
    %v1563 = vld [vmem:[#allocation3 + $0x160] sm:$0xf]
    %v1564 = vld [vmem:[#allocation3 + $0x164] sm:$0xf]
    %v1565 = vld [vmem:[#allocation3 + $0x168] sm:$0xf]
    %v1566 = vld [vmem:[#allocation3 + $0x16c] sm:$0xf]
    %v1571 = vunpack.c.l.b16 %v1563
    %v1572 = vunpack.c.l.b16 %v1564
    %v1573 = vunpack.c.l.b16 %v1565
    %v1574 = vunpack.c.l.b16 %v1566
    %v1575 = vpack.c.b16 %v1572, %v1571
    %v1576 = vpack.c.b16 %v1574, %v1573
    %v1580 = vsel %vm784, %v1562, 0
    %1582 = vmatpush.bf16.msra.mxu0 0
    %1583 = vmatpush.bf16.msra.mxu0 0
    %1584 = vmatpush.bf16.msra.mxu0 0
    %1585 = vmatpush.bf16.msra.mxu0 0
    %1586 = vmatpush.bf16.msra.mxu0 0
    %1587 = vmatpush.bf16.msra.mxu0 0
    %1588 = vmatpush.bf16.msra.mxu0 %v1576
    %1589 = vmatpush.bf16.msra.mxu0 %v1575
    %1590 = vmatmul.bf16.gmra.mxu0 %v1580
    %v1591 = vpop.f32.mrf.mxu0
    %v1592 = vadd.f32 0.0, %v1591
    %v1593 = vpop.f32.mrf.mxu0
    %1594 = vdwg.mxu0
    %v1595 = vadd.f32 %v1559, %v1592
    %s1596 = scalar_lea.vmem [#allocation2], 8
    %v1597 = vld [vmem:[%s1596] ss:$16 sm:$0x3]
    %v1598 = vpack.c.bf16 %v1597, %v1597
    %v1599 = vld [vmem:[#allocation3 + $0x170] sm:$0xf]
    %v1600 = vld [vmem:[#allocation3 + $0x174] sm:$0xf]
    %v1601 = vld [vmem:[#allocation3 + $0x178] sm:$0xf]
    %v1602 = vld [vmem:[#allocation3 + $0x17c] sm:$0xf]
    %v1607 = vunpack.c.l.b16 %v1599
    %v1608 = vunpack.c.l.b16 %v1600
    %v1609 = vunpack.c.l.b16 %v1601
    %v1610 = vunpack.c.l.b16 %v1602
    %v1611 = vpack.c.b16 %v1608, %v1607
    %v1612 = vpack.c.b16 %v1610, %v1609
    %v1616 = vsel %vm784, %v1598, 0
    %1618 = vmatpush.bf16.msra.mxu0 0
    %1619 = vmatpush.bf16.msra.mxu0 0
    %1620 = vmatpush.bf16.msra.mxu0 0
    %1621 = vmatpush.bf16.msra.mxu0 0
    %1622 = vmatpush.bf16.msra.mxu0 0
    %1623 = vmatpush.bf16.msra.mxu0 0
    %1624 = vmatpush.bf16.msra.mxu0 %v1612
    %1625 = vmatpush.bf16.msra.mxu0 %v1611
    %1626 = vmatmul.bf16.gmra.mxu0 %v1616
    %v1627 = vpop.f32.mrf.mxu0
    %v1628 = vadd.f32 0.0, %v1627
    %v1629 = vpop.f32.mrf.mxu0
    %1630 = vdwg.mxu0
    %v1631 = vadd.f32 %v1595, %v1628
    %s1632 = scalar_lea.vmem [#allocation2], 9
    %v1633 = vld [vmem:[%s1632] ss:$16 sm:$0x3]
    %v1634 = vpack.c.bf16 %v1633, %v1633
    %v1635 = vld [vmem:[#allocation3 + $0x180] sm:$0xf]
    %v1636 = vld [vmem:[#allocation3 + $0x184] sm:$0xf]
    %v1637 = vld [vmem:[#allocation3 + $0x188] sm:$0xf]
    %v1638 = vld [vmem:[#allocation3 + $0x18c] sm:$0xf]
    %v1643 = vunpack.c.l.b16 %v1635
    %v1644 = vunpack.c.l.b16 %v1636
    %v1645 = vunpack.c.l.b16 %v1637
    %v1646 = vunpack.c.l.b16 %v1638
    %v1647 = vpack.c.b16 %v1644, %v1643
    %v1648 = vpack.c.b16 %v1646, %v1645
    %v1652 = vsel %vm784, %v1634, 0
    %1654 = vmatpush.bf16.msra.mxu0 0
    %1655 = vmatpush.bf16.msra.mxu0 0
    %1656 = vmatpush.bf16.msra.mxu0 0
    %1657 = vmatpush.bf16.msra.mxu0 0
    %1658 = vmatpush.bf16.msra.mxu0 0
    %1659 = vmatpush.bf16.msra.mxu0 0
    %1660 = vmatpush.bf16.msra.mxu0 %v1648
    %1661 = vmatpush.bf16.msra.mxu0 %v1647
    %1662 = vmatmul.bf16.gmra.mxu0 %v1652
    %v1663 = vpop.f32.mrf.mxu0
    %v1664 = vadd.f32 0.0, %v1663
    %v1665 = vpop.f32.mrf.mxu0
    %1666 = vdwg.mxu0
    %v1667 = vadd.f32 %v1631, %v1664
    %s1668 = scalar_lea.vmem [#allocation2], 10
    %v1669 = vld [vmem:[%s1668] ss:$16 sm:$0x3]
    %v1670 = vpack.c.bf16 %v1669, %v1669
    %v1671 = vld [vmem:[#allocation3 + $0x190] sm:$0xf]
    %v1672 = vld [vmem:[#allocation3 + $0x194] sm:$0xf]
    %v1673 = vld [vmem:[#allocation3 + $0x198] sm:$0xf]
    %v1674 = vld [vmem:[#allocation3 + $0x19c] sm:$0xf]
    %v1679 = vunpack.c.l.b16 %v1671
    %v1680 = vunpack.c.l.b16 %v1672
    %v1681 = vunpack.c.l.b16 %v1673
    %v1682 = vunpack.c.l.b16 %v1674
    %v1683 = vpack.c.b16 %v1680, %v1679
    %v1684 = vpack.c.b16 %v1682, %v1681
    %v1688 = vsel %vm784, %v1670, 0
    %1690 = vmatpush.bf16.msra.mxu0 0
    %1691 = vmatpush.bf16.msra.mxu0 0
    %1692 = vmatpush.bf16.msra.mxu0 0
    %1693 = vmatpush.bf16.msra.mxu0 0
    %1694 = vmatpush.bf16.msra.mxu0 0
    %1695 = vmatpush.bf16.msra.mxu0 0
    %1696 = vmatpush.bf16.msra.mxu0 %v1684
    %1697 = vmatpush.bf16.msra.mxu0 %v1683
    %1698 = vmatmul.bf16.gmra.mxu0 %v1688
    %v1699 = vpop.f32.mrf.mxu0
    %v1700 = vadd.f32 0.0, %v1699
    %v1701 = vpop.f32.mrf.mxu0
    %1702 = vdwg.mxu0
    %v1703 = vadd.f32 %v1667, %v1700
    %s1704 = scalar_lea.vmem [#allocation2], 11
    %v1705 = vld [vmem:[%s1704] ss:$16 sm:$0x3]
    %v1706 = vpack.c.bf16 %v1705, %v1705
    %v1707 = vld [vmem:[#allocation3 + $0x1a0] sm:$0xf]
    %v1708 = vld [vmem:[#allocation3 + $0x1a4] sm:$0xf]
    %v1709 = vld [vmem:[#allocation3 + $0x1a8] sm:$0xf]
    %v1710 = vld [vmem:[#allocation3 + $0x1ac] sm:$0xf]
    %v1715 = vunpack.c.l.b16 %v1707
    %v1716 = vunpack.c.l.b16 %v1708
    %v1717 = vunpack.c.l.b16 %v1709
    %v1718 = vunpack.c.l.b16 %v1710
    %v1719 = vpack.c.b16 %v1716, %v1715
    %v1720 = vpack.c.b16 %v1718, %v1717
    %v1724 = vsel %vm784, %v1706, 0
    %1726 = vmatpush.bf16.msra.mxu0 0
    %1727 = vmatpush.bf16.msra.mxu0 0
    %1728 = vmatpush.bf16.msra.mxu0 0
    %1729 = vmatpush.bf16.msra.mxu0 0
    %1730 = vmatpush.bf16.msra.mxu0 0
    %1731 = vmatpush.bf16.msra.mxu0 0
    %1732 = vmatpush.bf16.msra.mxu0 %v1720
    %1733 = vmatpush.bf16.msra.mxu0 %v1719
    %1734 = vmatmul.bf16.gmra.mxu0 %v1724
    %v1735 = vpop.f32.mrf.mxu0
    %v1736 = vadd.f32 0.0, %v1735
    %v1737 = vpop.f32.mrf.mxu0
    %1738 = vdwg.mxu0
    %v1739 = vadd.f32 %v1703, %v1736
    %s1740 = scalar_lea.vmem [#allocation2], 12
    %v1741 = vld [vmem:[%s1740] ss:$16 sm:$0x3]
    %v1742 = vpack.c.bf16 %v1741, %v1741
    %v1743 = vld [vmem:[#allocation3 + $0x1b0] sm:$0xf]
    %v1744 = vld [vmem:[#allocation3 + $0x1b4] sm:$0xf]
    %v1745 = vld [vmem:[#allocation3 + $0x1b8] sm:$0xf]
    %v1746 = vld [vmem:[#allocation3 + $0x1bc] sm:$0xf]
    %v1751 = vunpack.c.l.b16 %v1743
    %v1752 = vunpack.c.l.b16 %v1744
    %v1753 = vunpack.c.l.b16 %v1745
    %v1754 = vunpack.c.l.b16 %v1746
    %v1755 = vpack.c.b16 %v1752, %v1751
    %v1756 = vpack.c.b16 %v1754, %v1753
    %v1760 = vsel %vm784, %v1742, 0
    %1762 = vmatpush.bf16.msra.mxu0 0
    %1763 = vmatpush.bf16.msra.mxu0 0
    %1764 = vmatpush.bf16.msra.mxu0 0
    %1765 = vmatpush.bf16.msra.mxu0 0
    %1766 = vmatpush.bf16.msra.mxu0 0
    %1767 = vmatpush.bf16.msra.mxu0 0
    %1768 = vmatpush.bf16.msra.mxu0 %v1756
    %1769 = vmatpush.bf16.msra.mxu0 %v1755
    %1770 = vmatmul.bf16.gmra.mxu0 %v1760
    %v1771 = vpop.f32.mrf.mxu0
    %v1772 = vadd.f32 0.0, %v1771
    %v1773 = vpop.f32.mrf.mxu0
    %1774 = vdwg.mxu0
    %v1775 = vadd.f32 %v1739, %v1772
    %s1776 = scalar_lea.vmem [#allocation2], 13
    %v1777 = vld [vmem:[%s1776] ss:$16 sm:$0x3]
    %v1778 = vpack.c.bf16 %v1777, %v1777
    %v1779 = vld [vmem:[#allocation3 + $0x1c0] sm:$0xf]
    %v1780 = vld [vmem:[#allocation3 + $0x1c4] sm:$0xf]
    %v1781 = vld [vmem:[#allocation3 + $0x1c8] sm:$0xf]
    %v1782 = vld [vmem:[#allocation3 + $0x1cc] sm:$0xf]
    %v1787 = vunpack.c.l.b16 %v1779
    %v1788 = vunpack.c.l.b16 %v1780
    %v1789 = vunpack.c.l.b16 %v1781
    %v1790 = vunpack.c.l.b16 %v1782
    %v1791 = vpack.c.b16 %v1788, %v1787
    %v1792 = vpack.c.b16 %v1790, %v1789
    %v1796 = vsel %vm784, %v1778, 0
    %1798 = vmatpush.bf16.msra.mxu0 0
    %1799 = vmatpush.bf16.msra.mxu0 0
    %1800 = vmatpush.bf16.msra.mxu0 0
    %1801 = vmatpush.bf16.msra.mxu0 0
    %1802 = vmatpush.bf16.msra.mxu0 0
    %1803 = vmatpush.bf16.msra.mxu0 0
    %1804 = vmatpush.bf16.msra.mxu0 %v1792
    %1805 = vmatpush.bf16.msra.mxu0 %v1791
    %1806 = vmatmul.bf16.gmra.mxu0 %v1796
    %v1807 = vpop.f32.mrf.mxu0
    %v1808 = vadd.f32 0.0, %v1807
    %v1809 = vpop.f32.mrf.mxu0
    %1810 = vdwg.mxu0
    %v1811 = vadd.f32 %v1775, %v1808
    %s1812 = scalar_lea.vmem [#allocation2], 14
    %v1813 = vld [vmem:[%s1812] ss:$16 sm:$0x3]
    %v1814 = vpack.c.bf16 %v1813, %v1813
    %v1815 = vld [vmem:[#allocation3 + $0x1d0] sm:$0xf]
    %v1816 = vld [vmem:[#allocation3 + $0x1d4] sm:$0xf]
    %v1817 = vld [vmem:[#allocation3 + $0x1d8] sm:$0xf]
    %v1818 = vld [vmem:[#allocation3 + $0x1dc] sm:$0xf]
    %v1823 = vunpack.c.l.b16 %v1815
    %v1824 = vunpack.c.l.b16 %v1816
    %v1825 = vunpack.c.l.b16 %v1817
    %v1826 = vunpack.c.l.b16 %v1818
    %v1827 = vpack.c.b16 %v1824, %v1823
    %v1828 = vpack.c.b16 %v1826, %v1825
    %v1832 = vsel %vm784, %v1814, 0
    %1834 = vmatpush.bf16.msra.mxu0 0
    %1835 = vmatpush.bf16.msra.mxu0 0
    %1836 = vmatpush.bf16.msra.mxu0 0
    %1837 = vmatpush.bf16.msra.mxu0 0
    %1838 = vmatpush.bf16.msra.mxu0 0
    %1839 = vmatpush.bf16.msra.mxu0 0
    %1840 = vmatpush.bf16.msra.mxu0 %v1828
    %1841 = vmatpush.bf16.msra.mxu0 %v1827
    %1842 = vmatmul.bf16.gmra.mxu0 %v1832
    %v1843 = vpop.f32.mrf.mxu0
    %v1844 = vadd.f32 0.0, %v1843
    %v1845 = vpop.f32.mrf.mxu0
    %1846 = vdwg.mxu0
    %v1847 = vadd.f32 %v1811, %v1844
    %s1848 = scalar_lea.vmem [#allocation2], 15
    %v1849 = vld [vmem:[%s1848] ss:$16 sm:$0x3]
    %v1850 = vpack.c.bf16 %v1849, %v1849
    %v1851 = vld [vmem:[#allocation3 + $0x1e0] sm:$0xf]
    %v1852 = vld [vmem:[#allocation3 + $0x1e4] sm:$0xf]
    %v1853 = vld [vmem:[#allocation3 + $0x1e8] sm:$0xf]
    %v1854 = vld [vmem:[#allocation3 + $0x1ec] sm:$0xf]
    %v1859 = vunpack.c.l.b16 %v1851
    %v1860 = vunpack.c.l.b16 %v1852
    %v1861 = vunpack.c.l.b16 %v1853
    %v1862 = vunpack.c.l.b16 %v1854
    %v1863 = vpack.c.b16 %v1860, %v1859
    %v1864 = vpack.c.b16 %v1862, %v1861
    %v1868 = vsel %vm784, %v1850, 0
    %1870 = vmatpush.bf16.msra.mxu0 0
    %1871 = vmatpush.bf16.msra.mxu0 0
    %1872 = vmatpush.bf16.msra.mxu0 0
    %1873 = vmatpush.bf16.msra.mxu0 0
    %1874 = vmatpush.bf16.msra.mxu0 0
    %1875 = vmatpush.bf16.msra.mxu0 0
    %1876 = vmatpush.bf16.msra.mxu0 %v1864
    %1877 = vmatpush.bf16.msra.mxu0 %v1863
    %1878 = vmatmul.bf16.gmra.mxu0 %v1868
    %v1879 = vpop.f32.mrf.mxu0
    %v1880 = vadd.f32 0.0, %v1879
    %v1881 = vpop.f32.mrf.mxu0
    %1882 = vdwg.mxu0
    %v1883 = vadd.f32 %v1847, %v1880
    %v1884 = vld [vmem:[%s2 + $0x5] sm:$0x1]
    %v1885 = vperm.slane %v1884, 0
    %v1886 = vadd.f32 %v1883, %v1885
    %v1887 = vmax.f32 %v1886, 0.0
    %v1888 = vpack.c.bf16 %v1887, %v1887
    %v1889 = vld [vmem:[#allocation3 + $0x1f0] sm:$0xf]
    %v1890 = vld [vmem:[#allocation3 + $0x1f4] sm:$0xf]
    %v1891 = vld [vmem:[#allocation3 + $0x1f8] sm:$0xf]
    %v1892 = vld [vmem:[#allocation3 + $0x1fc] sm:$0xf]
    %v1893 = vld [vmem:[#allocation3 + $0x200] sm:$0xf]
    %v1894 = vld [vmem:[#allocation3 + $0x204] sm:$0xf]
    %v1895 = vld [vmem:[#allocation3 + $0x208] sm:$0xf]
    %v1896 = vld [vmem:[#allocation3 + $0x20c] sm:$0xf]
    %v1897 = vld [vmem:[#allocation3 + $0x210] sm:$0xf]
    %v1898 = vld [vmem:[#allocation3 + $0x214] sm:$0xf]
    %v1899 = vld [vmem:[#allocation3 + $0x218] sm:$0xf]
    %v1900 = vld [vmem:[#allocation3 + $0x21c] sm:$0xf]
    %v1901 = vld [vmem:[#allocation3 + $0x220] sm:$0xf]
    %v1902 = vld [vmem:[#allocation3 + $0x224] sm:$0xf]
    %v1903 = vld [vmem:[#allocation3 + $0x228] sm:$0xf]
    %v1904 = vld [vmem:[#allocation3 + $0x22c] sm:$0xf]
    %v1905 = vld [vmem:[%s2 + $0x6] sm:$0x1]
    %v1906 = vperm.slane %v1905, 0
    %v1923 = vunpack.c.l.b16 %v1889
    %v1924 = vunpack.c.l.b16 %v1890
    %v1925 = vunpack.c.l.b16 %v1891
    %v1926 = vunpack.c.l.b16 %v1892
    %v1927 = vunpack.c.l.b16 %v1893
    %v1928 = vunpack.c.l.b16 %v1894
    %v1929 = vunpack.c.l.b16 %v1895
    %v1930 = vunpack.c.l.b16 %v1896
    %v1931 = vunpack.c.l.b16 %v1897
    %v1932 = vunpack.c.l.b16 %v1898
    %v1933 = vunpack.c.l.b16 %v1899
    %v1934 = vunpack.c.l.b16 %v1900
    %v1935 = vunpack.c.l.b16 %v1901
    %v1936 = vunpack.c.l.b16 %v1902
    %v1937 = vunpack.c.l.b16 %v1903
    %v1938 = vunpack.c.l.b16 %v1904
    %v1939 = vpack.c.b16 %v1924, %v1923
    %v1940 = vpack.c.b16 %v1926, %v1925
    %v1941 = vpack.c.b16 %v1928, %v1927
    %v1942 = vpack.c.b16 %v1930, %v1929
    %v1943 = vpack.c.b16 %v1932, %v1931
    %v1944 = vpack.c.b16 %v1934, %v1933
    %v1945 = vpack.c.b16 %v1936, %v1935
    %v1946 = vpack.c.b16 %v1938, %v1937
    %1955 = vmatpush.bf16.msra.mxu0 %v1946
    %1956 = vmatpush.bf16.msra.mxu0 %v1945
    %1957 = vmatpush.bf16.msra.mxu0 %v1944
    %1958 = vmatpush.bf16.msra.mxu0 %v1943
    %1959 = vmatpush.bf16.msra.mxu0 %v1942
    %1960 = vmatpush.bf16.msra.mxu0 %v1941
    %1961 = vmatpush.bf16.msra.mxu0 %v1940
    %1962 = vmatpush.bf16.msra.mxu0 %v1939
    %1963 = vmatmul.bf16.gmra.mxu0 %v1888
    %v1964 = vpop.f32.mrf.mxu0
    %v1965 = vadd.f32 %v1906, %v1964
    %v1966 = vpop.f32.mrf.mxu0
    %1967 = vdwg.mxu0
    %vm1968 = vcmask 58368
    %1969 = vst.msk [vmem:[#allocation6] sm:$0x3] %vm1968, %v1965
    // Predicated region
    $region18: #{encoder_conv_forward.1} parent=1 // pred_check
      _
    $region19: #{encoder_conv_forward.1} parent=1 // pred_check_branch
      %1971 = sbr.rel (0) target = $region21
    $region20: #{encoder_conv_forward.1} parent=1 // pred_region
      %1973 = vsyncadd [#allocation5], 0
      %s1975 = sshll.u32 [#allocation6], 4
      %s1976 = int_to_ptr.vmem [resolvable:$true] %s1975
      %s1977 = sshll.u32 %s3, 4
      %s1978 = int_to_ptr.hbm [resolvable:$true] %s1977
      %1980 = dma.vmem_to_hbm [thread:$0]  %s1976, 32, %s1978, [#allocation5]
    $region21: #{encoder_conv_forward.1} parent=1 // pred_fallthru
      _
    // Predicated region
    $region22: #{encoder_conv_forward.1} parent=1 // pred_check
      _
    $region23: #{encoder_conv_forward.1} parent=1 // pred_check_branch
      %1982 = sbr.rel (0) target = $region25
    $region24: #{encoder_conv_forward.1} parent=1 // pred_region
      %1984 = dma.done [#allocation5], 32
    $region25: #{encoder_conv_forward.1} parent=1 // pred_fallthru
      _
    %1985 = vsyncpa [#allocation4], 1
    %1986 = vsyncpa [#allocation5], 1

</llo_original>
